<compile_context>
chip_gen: v6e
topology: v6e:2x2x1
jax: 0.10.0
libtpu: 0.0.40
codegen_flags: <defaults>
</compile_context>

<pallas_src>
import functools

import jax
import jax.numpy as jnp
from jax import lax
from jax.experimental import pallas as pl
from jax.experimental.pallas import tpu as pltpu


# --------------------------------------------------------------------------- #
# VMEM budgeting / tile selection
# --------------------------------------------------------------------------- #
def _vmem_capacity_bytes():
    """Physical VMEM of the current TPU generation (conservative fallback)."""
    try:
        return int(pltpu.get_tpu_info().vmem_capacity_bytes)
    except Exception:
        return 64 << 20  # v7x per-TensorCore capacity (most restrictive)


def _lane_pad(n):
    return ((max(int(n), 1) + 127) // 128) * 128


def _estimate_vmem(block_q, block_kv, hidden, num_heads, head_dim,
                   out_bytes, mask_bytes):
    """Rough per-step VMEM footprint (double-buffered blocks + scratch)."""
    q_blk = 2 * block_q * hidden * 2                      # bf16 Q, double-buffered
    k_blk = 2 * block_kv * hidden * 2                     # bf16 K
    v_blk = 2 * block_kv * hidden * 2                     # bf16 V
    o_blk = 2 * block_q * hidden * out_bytes              # output
    m_blk = 2 * block_q * _lane_pad(block_kv) * mask_bytes if mask_bytes else 0
    qs = block_q * hidden * 2                              # scaled-Q scratch (bf16)
    ml = num_heads * block_q * 128 * 4                     # fused m/l, lane pad 2->128
    acc = num_heads * block_q * _lane_pad(head_dim) * 4    # f32 accumulator
    return q_blk + k_blk + v_blk + o_blk + m_blk + qs + ml + acc


def _divisor_candidates(dim, candidates):
    """Candidates (descending) that evenly divide `dim`; falls back to full dim."""
    out = [c for c in candidates if c <= dim and dim % c == 0]
    return out if out else [dim]


def _select_tiles(b, s, hidden, num_heads, head_dim, out_bytes, mask_bytes, budget):
    # block_q candidates are multiples of 16 (bf16 sublane pack) except the full-S
    # fallback; block_q is prioritized because K/V HBM re-streaming scales with
    # the number of q-tile passes.
    q_cands = _divisor_candidates(s, (1024, 512, 256, 128, 64, 32, 16))
    kv_cands = _divisor_candidates(s, (512, 256, 128))
    block_q, block_kv = q_cands[-1], kv_cands[-1]
    for bq in q_cands:
        for bkv in kv_cands:
            if _estimate_vmem(bq, bkv, hidden, num_heads, head_dim,
                              out_bytes, mask_bytes) <= budget:
                return bq, bkv
    return block_q, block_kv  # smallest legal tiles; let the compiler decide


# --------------------------------------------------------------------------- #
# Kernel
# --------------------------------------------------------------------------- #
def _npu_flash_attention_kernel(*refs, num_heads, scale, has_mask):
    """One (batch, q-tile, kv-tile) grid cell of flash-style attention.

    refs (has_mask=True):  q, k, v, mask, o, qs_sc, ml_sc, acc_sc
    refs (has_mask=False): q, k, v,       o, qs_sc, ml_sc, acc_sc

    Blocks:  q/o (1, block_q, hidden); k/v (1, block_kv, hidden) bf16;
             mask (1, 1, block_q, block_kv) (0 => masked).
    Scratch: qs_sc  (block_q, hidden) bf16      -- pre-scaled Q, written at ki==0
             ml_sc  (H, block_q, 2)  f32        -- running max (lane 0) / sum (lane 1)
             acc_sc (H, block_q, head_dim) f32  -- output accumulator
    """
    if has_mask:
        q_ref, k_ref, v_ref, mask_ref, o_ref, qs_sc, ml_sc, acc_sc = refs
    else:
        q_ref, k_ref, v_ref, o_ref, qs_sc, ml_sc, acc_sc = refs
        mask_ref = None

    ki = pl.program_id(2)
    hidden = q_ref.shape[-1]
    head_dim = hidden // num_heads
    block_q = qs_sc.shape[0]

    @pl.when(ki == 0)
    def _init():
        # Hoisted Q prep: scale once per q-tile (f32 intermediate, stored bf16),
        # reused by every kv step.
        qs_sc[...] = (q_ref[0].astype(jnp.float32) * scale).astype(jnp.bfloat16)
        ml_sc[:, :, 0:1] = jnp.full((num_heads, block_q, 1), -jnp.inf, jnp.float32)
        ml_sc[:, :, 1:2] = jnp.zeros((num_heads, block_q, 1), jnp.float32)
        acc_sc[...] = jnp.zeros_like(acc_sc)

    if has_mask:
        # Shared by all heads of this (q-tile, kv-tile); compared in its own dtype.
        valid = mask_ref[0, 0] != 0                         # (block_q, block_kv)

    # All heads of this batch live in the same lane-dense (tile, hidden) block;
    # heads are static lane slices (num_heads is small and static here).
    for h in range(num_heads):
        hsl = slice(h * head_dim, (h + 1) * head_dim)
        qh = qs_sc[:, hsl]                                   # bf16, already scaled
        kh = k_ref[0, :, hsl]                                # bf16
        vh = v_ref[0, :, hsl]                                # bf16

        # scores = Qh @ Kh^T via trailing-dim contraction (no explicit transpose).
        s = lax.dot_general(qh, kh, (((1,), (1,)), ((), ())),
                            preferred_element_type=jnp.float32)     # (tq, tkv) f32
        if has_mask:
            s = jnp.where(valid, s, -1e9)                            # masked_fill

        # Online softmax update (all bookkeeping in f32).
        m_prev = ml_sc[h, :, 0:1]                                    # (tq, 1)
        l_prev = ml_sc[h, :, 1:2]                                    # (tq, 1)
        m_new = jnp.maximum(m_prev, jnp.max(s, axis=-1, keepdims=True))
        alpha = jnp.exp(m_prev - m_new)
        p = jnp.exp(s - m_new)
        ml_sc[h, :, 1:2] = alpha * l_prev + jnp.sum(p, axis=-1, keepdims=True)
        acc_sc[h] = alpha * acc_sc[h] + jnp.dot(
            p.astype(jnp.bfloat16), vh, preferred_element_type=jnp.float32)
        ml_sc[h, :, 0:1] = m_new

    @pl.when(ki == pl.num_programs(2) - 1)
    def _finalize():
        # Per-head normalize + store (no (block_q, hidden) concatenate temporary);
        # approx reciprocal runs on the otherwise idle EUP slot.
        for h in range(num_heads):
            hsl = slice(h * head_dim, (h + 1) * head_dim)
            inv_l = pl.reciprocal(ml_sc[h, :, 1:2], approx=True)     # (tq, 1)
            o_ref[0, :, hsl] = (acc_sc[h] * inv_l).astype(o_ref.dtype)


# --------------------------------------------------------------------------- #
# Wrapper
# --------------------------------------------------------------------------- #
def npu_attention(query, key, value, attention_mask, num_heads,
                  *, block_q=None, block_kv=None):
    """Pallas TPU implementation of NPUAttentionKernel._npu_attention.

    query/key/value: (B, S, hidden); streamed bf16, output in query.dtype.
    attention_mask:  None, or (B, 1, S, S) with 0 => masked (any int/bool dtype).
    """
    b, s, hidden = query.shape
    assert hidden % num_heads == 0
    head_dim = hidden // num_heads
    scale = float(head_dim) ** (-0.5)
    out_dtype = query.dtype
    out_bytes = jnp.dtype(out_dtype).itemsize
    has_mask = attention_mask is not None

    # bf16 at the HBM boundary: halves K/V re-streaming bytes and VMEM blocks.
    # (Softmax / accumulation stay f32 inside the kernel.)
    q_bf = query.astype(jnp.bfloat16)
    k_bf = key.astype(jnp.bfloat16)
    v_bf = value.astype(jnp.bfloat16)

    # Per-generation VMEM budget (~80% of physical) drives tile selection and an
    # explicit scoped-VMEM limit for the compiler.
    cap = _vmem_capacity_bytes()
    budget = min(int(cap * 0.8), cap - (8 << 20))
    mask_bytes_est = 1 if has_mask else 0
    auto_bq, auto_bkv = _select_tiles(b, s, hidden, num_heads, head_dim,
                                      out_bytes, mask_bytes_est, budget)
    block_q = block_q or auto_bq
    block_kv = block_kv or auto_bkv

    # v7x: guarantee >=2 units of parallel grid work for the two TensorCores.
    while (b * (s // block_q) < 2 and block_q >= 32
           and block_q % 2 == 0 and s % (block_q // 2) == 0):
        block_q //= 2

    grid = (b, s // block_q, s // block_kv)

    q_spec = pl.BlockSpec((1, block_q, hidden), lambda bi, qi, ki: (bi, qi, 0))
    kv_spec = pl.BlockSpec((1, block_kv, hidden), lambda bi, qi, ki: (bi, ki, 0))
    out_spec = pl.BlockSpec((1, block_q, hidden), lambda bi, qi, ki: (bi, qi, 0))

    in_specs = [q_spec, kv_spec, kv_spec]
    inputs = [q_bf, k_bf, v_bf]
    mask_bytes = 0
    if has_mask:
        # int8 only when the mask block is (32, 128)-tile aligned; otherwise int32
        # (small / odd sequence lengths stay on native tiles).
        int8_ok = (block_q % 32 == 0) and (block_kv % 128 == 0)
        mask_dtype = jnp.int8 if int8_ok else jnp.int32
        mask = (attention_mask != 0).astype(mask_dtype)
        mask_bytes = jnp.dtype(mask_dtype).itemsize
        in_specs.append(pl.BlockSpec((1, 1, block_q, block_kv),
                                     lambda bi, qi, ki: (bi, 0, qi, ki)))
        inputs.append(mask)

    need = _estimate_vmem(block_q, block_kv, hidden, num_heads, head_dim,
                          out_bytes, mask_bytes)
    vmem_limit = max(min(int(need * 1.3) + (4 << 20), budget), 16 << 20)

    kernel = functools.partial(_npu_flash_attention_kernel,
                               num_heads=num_heads, scale=scale, has_mask=has_mask)

    return pl.pallas_call(
        kernel,
        out_shape=jax.ShapeDtypeStruct((b, s, hidden), out_dtype),
        grid_spec=pltpu.PrefetchScalarGridSpec(
            num_scalar_prefetch=0,
            grid=grid,
            in_specs=in_specs,
            out_specs=out_spec,
            scratch_shapes=[
                pltpu.VMEM((block_q, hidden), jnp.bfloat16),               # scaled Q
                pltpu.VMEM((num_heads, block_q, 2), jnp.float32),          # fused m/l
                pltpu.VMEM((num_heads, block_q, head_dim), jnp.float32),   # accumulator
            ],
        ),
        compiler_params=pltpu.CompilerParams(
            dimension_semantics=("parallel", "parallel", "arbitrary"),
            vmem_limit_bytes=int(vmem_limit),
        ),
    )(*inputs)


# --------------------------------------------------------------------------- #
# Module-level analogues
# --------------------------------------------------------------------------- #
class NPUAttentionKernelJax:
    """JAX/Pallas analogue of NPUAttentionKernel."""

    def __init__(self, hidden_size, num_heads):
        self.hidden_size = hidden_size
        self.num_heads = num_heads
        self.head_dim = hidden_size // num_heads

    def __call__(self, query, key, value, attention_mask=None):
        # mask=None path uses a dedicated kernel variant (no all-ones mask tensor).
        return npu_attention(query, key, value, attention_mask, self.num_heads)


class NPUModelWrapperJax:
    """JAX analogue of NPUModelWrapper: forward delegates to the base model."""

    def __init__(self, base_model):
        self.base_model = base_model
        self.npu_kernels = {}

    def add_npu_attention_layers(self, hidden_size, num_heads, num_layers):
        npu_layer_count = num_layers // 2
        for layer_idx in range(npu_layer_count):
            self.npu_kernels[f"npu_attention_{layer_idx}"] = NPUAttentionKernelJax(
                hidden_size=hidden_size, num_heads=num_heads
            )
        return len(self.npu_kernels)

    def forward(self, *args, **kwargs):
        return self.base_model(*args, **kwargs)

    def __call__(self, *args, **kwargs):
        return self.forward(*args, **kwargs)


def _reference_attention(q, k, v, mask, num_heads):
    """Pure-JAX f32 reference of the PyTorch _npu_attention."""
    b, s, hidden = q.shape
    head_dim = hidden // num_heads
    scale = head_dim ** (-0.5)

    def split(x):
        return x.reshape(b, s, num_heads, head_dim).transpose(0, 2, 1, 3)

    qh, kh, vh = split(q), split(k), split(v)
    scores = jnp.einsum("bhqd,bhkd->bhqk", qh, kh) * scale
    if mask is not None:
        scores = jnp.where(mask == 0, -1e9, scores)
    attn = jax.nn.softmax(scores, axis=-1)
    out = jnp.einsum("bhqk,bhkd->bhqd", attn, vh)
    return out.transpose(0, 2, 1, 3).reshape(b, s, hidden)


if __name__ == "__main__":
    # Small shapes consistent with the module: batch=2, seq=8, hidden=32, heads=4.
    B, S, HIDDEN, NUM_HEADS = 2, 8, 32, 4

    key = jax.random.PRNGKey(0)
    kq, kk, kv, km = jax.random.split(key, 4)
    query = jax.random.normal(kq, (B, S, HIDDEN), dtype=jnp.float32)
    key_t = jax.random.normal(kk, (B, S, HIDDEN), dtype=jnp.float32)
    value = jax.random.normal(kv, (B, S, HIDDEN), dtype=jnp.float32)
    # Deterministic 0/1 attention mask (0 = masked).
    attention_mask = (jax.random.uniform(km, (B, 1, S, S)) > 0.2).astype(jnp.int32)

    base_model = NPUAttentionKernelJax(hidden_size=HIDDEN, num_heads=NUM_HEADS)
    wrapper = NPUModelWrapperJax(base_model)
    wrapper.add_npu_attention_layers(HIDDEN, NUM_HEADS, num_layers=4)

    out_masked = jax.block_until_ready(wrapper(query, key_t, value, attention_mask))
    out_unmasked = jax.block_until_ready(wrapper(query, key_t, value))  # no-mask variant

    ref_masked = _reference_attention(query, key_t, value, attention_mask, NUM_HEADS)
    ref_unmasked = _reference_attention(query, key_t, value, None, NUM_HEADS)

    assert out_masked.shape == (B, S, HIDDEN)
    assert out_unmasked.shape == (B, S, HIDDEN)
    # bf16 HBM streaming + bf16 MXU operands + approximate reciprocal: compare
    # against the f32 reference with a correspondingly looser tolerance.
    assert jnp.allclose(out_masked, ref_masked, atol=5e-2, rtol=5e-2)
    assert jnp.allclose(out_unmasked, ref_unmasked, atol=5e-2, rtol=5e-2)

    print("KERNEL_OK")
</pallas_src>

<mosaic_0001>
module attributes {stable_mosaic.version = 11 : i64} {
  func.func @_npu_flash_attention_kernel(%arg0: i32, %arg1: i32, %arg2: i32, %arg3: memref<1x8x32xbf16, #tpu.memory_space<vmem>>, %arg4: memref<1x8x32xbf16, #tpu.memory_space<vmem>>, %arg5: memref<1x8x32xbf16, #tpu.memory_space<vmem>>, %arg6: memref<1x1x8x8xi32, #tpu.memory_space<vmem>>, %arg7: memref<1x8x32xf32, #tpu.memory_space<vmem>>, %arg8: memref<8x32xbf16, #tpu.memory_space<vmem>>, %arg9: memref<4x8x2xf32, #tpu.memory_space<vmem>>, %arg10: memref<4x8x8xf32, #tpu.memory_space<vmem>>) attributes {dimension_semantics = [#tpu.dimension_semantics<parallel>, #tpu.dimension_semantics<parallel>, #tpu.dimension_semantics<arbitrary>], iteration_bounds = array<i64: 2, 1, 1>, scalar_prefetch = 0 : i64, scratch_operands = 3 : i64, tpu.core_type = #tpu.core_type<tc>, window_params = [{transform_indices = @transform_0, window_bounds = array<i64: 1, 8, 32>}, {transform_indices = @transform_1, window_bounds = array<i64: 1, 8, 32>}, {transform_indices = @transform_2, window_bounds = array<i64: 1, 8, 32>}, {transform_indices = @transform_3, window_bounds = array<i64: 1, 1, 8, 8>}, {transform_indices = @transform_4, window_bounds = array<i64: 1, 8, 32>}]} {
    %c0_i32 = arith.constant 0 : i32
    %0 = arith.cmpi eq, %arg2, %c0_i32 : i32
    %1 = arith.extui %0 : i1 to i32
    %c0_i32_0 = arith.constant 0 : i32
    %2 = arith.cmpi ne, %1, %c0_i32_0 : i32
    scf.if %2 {
      %c0_124 = arith.constant 0 : index
      %c0_125 = arith.constant 0 : index
      %c0_126 = arith.constant 0 : index
      %170 = vector.load %arg3[%c0_124, %c0_125, %c0_126] : memref<1x8x32xbf16, #tpu.memory_space<vmem>>, vector<1x8x32xbf16>
      %171 = vector.shape_cast %170 : vector<1x8x32xbf16> to vector<8x32xbf16>
      %172 = arith.extf %171 : vector<8x32xbf16> to vector<8x32xf32>
      %cst_127 = arith.constant 0.353553385 : f32
      %173 = vector.broadcast %cst_127 : f32 to vector<8x32xf32>
      %174 = arith.mulf %172, %173 : vector<8x32xf32>
      %175 = arith.truncf %174 : vector<8x32xf32> to vector<8x32xbf16>
      %c0_128 = arith.constant 0 : index
      %c0_129 = arith.constant 0 : index
      %176 = vector.load %arg8[%c0_128, %c0_129] : memref<8x32xbf16, #tpu.memory_space<vmem>>, vector<8x32xbf16>
      tpu.vector_store %arg8[%c0_128, %c0_129], %175 {strides = array<i32>} : memref<8x32xbf16, #tpu.memory_space<vmem>>, vector<8x32xbf16>,
      %cst_130 = arith.constant 0xFF800000 : f32
      %177 = vector.broadcast %cst_130 : f32 to vector<4x8x1xf32>
      %c0_131 = arith.constant 0 : index
      %c0_132 = arith.constant 0 : index
      %c0_133 = arith.constant 0 : index
      %178 = vector.load %arg9[%c0_131, %c0_132, %c0_133] : memref<4x8x2xf32, #tpu.memory_space<vmem>>, vector<4x8x1xf32>
      tpu.vector_store %arg9[%c0_131, %c0_132, %c0_133], %177 {strides = array<i32>} : memref<4x8x2xf32, #tpu.memory_space<vmem>>, vector<4x8x1xf32>,
      %cst_134 = arith.constant 0.000000e+00 : f32
      %179 = vector.broadcast %cst_134 : f32 to vector<4x8x1xf32>
      %c0_135 = arith.constant 0 : index
      %c0_136 = arith.constant 0 : index
      %c1_137 = arith.constant 1 : index
      %180 = vector.load %arg9[%c0_135, %c0_136, %c1_137] : memref<4x8x2xf32, #tpu.memory_space<vmem>>, vector<4x8x1xf32>
      tpu.vector_store %arg9[%c0_135, %c0_136, %c1_137], %179 {strides = array<i32>} : memref<4x8x2xf32, #tpu.memory_space<vmem>>, vector<4x8x1xf32>,
      %cst_138 = arith.constant 0.000000e+00 : f32
      %181 = vector.broadcast %cst_138 : f32 to vector<4x8x8xf32>
      %c0_139 = arith.constant 0 : index
      %c0_140 = arith.constant 0 : index
      %c0_141 = arith.constant 0 : index
      %182 = vector.load %arg10[%c0_139, %c0_140, %c0_141] : memref<4x8x8xf32, #tpu.memory_space<vmem>>, vector<4x8x8xf32>
      tpu.vector_store %arg10[%c0_139, %c0_140, %c0_141], %181 {strides = array<i32>} : memref<4x8x8xf32, #tpu.memory_space<vmem>>, vector<4x8x8xf32>,
    } else {
    }
    %c0 = arith.constant 0 : index
    %c0_1 = arith.constant 0 : index
    %c0_2 = arith.constant 0 : index
    %c0_3 = arith.constant 0 : index
    %3 = vector.load %arg6[%c0, %c0_1, %c0_2, %c0_3] : memref<1x1x8x8xi32, #tpu.memory_space<vmem>>, vector<1x1x8x8xi32>
    %4 = vector.shape_cast %3 : vector<1x1x8x8xi32> to vector<8x8xi32>
    %c0_i32_4 = arith.constant 0 : i32
    %5 = vector.broadcast %c0_i32_4 : i32 to vector<8x8xi32>
    %6 = arith.cmpi ne, %4, %5 : vector<8x8xi32>
    %c0_5 = arith.constant 0 : index
    %c0_6 = arith.constant 0 : index
    %7 = vector.load %arg8[%c0_5, %c0_6] : memref<8x32xbf16, #tpu.memory_space<vmem>>, vector<8x8xbf16>
    %c0_7 = arith.constant 0 : index
    %c0_8 = arith.constant 0 : index
    %c0_9 = arith.constant 0 : index
    %8 = vector.load %arg4[%c0_7, %c0_8, %c0_9] : memref<1x8x32xbf16, #tpu.memory_space<vmem>>, vector<1x8x8xbf16>
    %9 = vector.shape_cast %8 : vector<1x8x8xbf16> to vector<8x8xbf16>
    %c0_10 = arith.constant 0 : index
    %c0_11 = arith.constant 0 : index
    %c0_12 = arith.constant 0 : index
    %10 = vector.load %arg5[%c0_10, %c0_11, %c0_12] : memref<1x8x32xbf16, #tpu.memory_space<vmem>>, vector<1x8x8xbf16>
    %11 = vector.shape_cast %10 : vector<1x8x8xbf16> to vector<8x8xbf16>
    %cst = arith.constant dense<0.000000e+00> : vector<8x8xf32>
    %12 = tpu.matmul %7, %9, %cst {dimension_numbers = #tpu.dot_dimension_numbers<[1], [1], [0], [0], [0, 0, 1, 0], [], []>} : vector<8x8xbf16>, vector<8x8xbf16>, vector<8x8xf32> -> vector<8x8xf32>
    %cst_13 = arith.constant -1.000000e+09 : f32
    %13 = vector.broadcast %cst_13 : f32 to vector<8x8xf32>
    %14 = arith.select %6, %12, %13 : vector<8x8xi1>, vector<8x8xf32>
    %c0_14 = arith.constant 0 : index
    %c0_15 = arith.constant 0 : index
    %c0_16 = arith.constant 0 : index
    %15 = vector.load %arg9[%c0_14, %c0_15, %c0_16] : memref<4x8x2xf32, #tpu.memory_space<vmem>>, vector<1x8x1xf32>
    %16 = vector.shape_cast %15 : vector<1x8x1xf32> to vector<8x1xf32>
    %c0_17 = arith.constant 0 : index
    %c0_18 = arith.constant 0 : index
    %c1 = arith.constant 1 : index
    %17 = vector.load %arg9[%c0_17, %c0_18, %c1] : memref<4x8x2xf32, #tpu.memory_space<vmem>>, vector<1x8x1xf32>
    %18 = vector.shape_cast %17 : vector<1x8x1xf32> to vector<8x1xf32>
    %cst_19 = arith.constant dense<0xFF800000> : vector<8xf32>
    %19 = vector.multi_reduction <maximumf>, %14, %cst_19 [1] : vector<8x8xf32> to vector<8xf32>
    %20 = vector.shape_cast %19 : vector<8xf32> to vector<8x1xf32>
    %21 = arith.maximumf %16, %20 : vector<8x1xf32>
    %22 = arith.subf %16, %21 : vector<8x1xf32>
    %23 = math.exp %22 : vector<8x1xf32>
    %24 = vector.broadcast %21 : vector<8x1xf32> to vector<8x8xf32>
    %25 = arith.subf %14, %24 : vector<8x8xf32>
    %26 = math.exp %25 : vector<8x8xf32>
    %27 = arith.mulf %23, %18 : vector<8x1xf32>
    %cst_20 = arith.constant dense<0.000000e+00> : vector<8xf32>
    %28 = vector.multi_reduction <add>, %26, %cst_20 [1] : vector<8x8xf32> to vector<8xf32>
    %29 = vector.shape_cast %28 : vector<8xf32> to vector<8x1xf32>
    %30 = arith.addf %27, %29 : vector<8x1xf32>
    %c0_21 = arith.constant 0 : index
    %c0_22 = arith.constant 0 : index
    %c1_23 = arith.constant 1 : index
    %31 = vector.load %arg9[%c0_21, %c0_22, %c1_23] : memref<4x8x2xf32, #tpu.memory_space<vmem>>, vector<1x8x1xf32>
    %32 = vector.shape_cast %31 : vector<1x8x1xf32> to vector<8x1xf32>
    %33 = vector.shape_cast %30 : vector<8x1xf32> to vector<1x8x1xf32>
    tpu.vector_store %arg9[%c0_21, %c0_22, %c1_23], %33 {strides = array<i32>} : memref<4x8x2xf32, #tpu.memory_space<vmem>>, vector<1x8x1xf32>,
    %c0_24 = arith.constant 0 : index
    %c0_25 = arith.constant 0 : index
    %c0_26 = arith.constant 0 : index
    %34 = vector.load %arg10[%c0_24, %c0_25, %c0_26] : memref<4x8x8xf32, #tpu.memory_space<vmem>>, vector<1x8x8xf32>
    %35 = vector.shape_cast %34 : vector<1x8x8xf32> to vector<8x8xf32>
    %36 = vector.broadcast %23 : vector<8x1xf32> to vector<8x8xf32>
    %37 = arith.mulf %36, %35 : vector<8x8xf32>
    %38 = arith.truncf %26 : vector<8x8xf32> to vector<8x8xbf16>
    %cst_27 = arith.constant dense<0.000000e+00> : vector<8x8xf32>
    %39 = tpu.matmul %38, %11, %cst_27 {dimension_numbers = #tpu.dot_dimension_numbers<[1], [0], [0], [1], [0, 0, 1, 1], [], []>} : vector<8x8xbf16>, vector<8x8xbf16>, vector<8x8xf32> -> vector<8x8xf32>
    %40 = arith.addf %37, %39 : vector<8x8xf32>
    %c0_28 = arith.constant 0 : index
    %c0_29 = arith.constant 0 : index
    %c0_30 = arith.constant 0 : index
    %41 = vector.load %arg10[%c0_28, %c0_29, %c0_30] : memref<4x8x8xf32, #tpu.memory_space<vmem>>, vector<1x8x8xf32>
    %42 = vector.shape_cast %41 : vector<1x8x8xf32> to vector<8x8xf32>
    %43 = vector.shape_cast %40 : vector<8x8xf32> to vector<1x8x8xf32>
    tpu.vector_store %arg10[%c0_28, %c0_29, %c0_30], %43 {strides = array<i32>} : memref<4x8x8xf32, #tpu.memory_space<vmem>>, vector<1x8x8xf32>,
    %c0_31 = arith.constant 0 : index
    %c0_32 = arith.constant 0 : index
    %c0_33 = arith.constant 0 : index
    %44 = vector.load %arg9[%c0_31, %c0_32, %c0_33] : memref<4x8x2xf32, #tpu.memory_space<vmem>>, vector<1x8x1xf32>
    %45 = vector.shape_cast %44 : vector<1x8x1xf32> to vector<8x1xf32>
    %46 = vector.shape_cast %21 : vector<8x1xf32> to vector<1x8x1xf32>
    tpu.vector_store %arg9[%c0_31, %c0_32, %c0_33], %46 {strides = array<i32>} : memref<4x8x2xf32, #tpu.memory_space<vmem>>, vector<1x8x1xf32>,
    %c0_34 = arith.constant 0 : index
    %c8 = arith.constant 8 : index
    %47 = vector.load %arg8[%c0_34, %c8] : memref<8x32xbf16, #tpu.memory_space<vmem>>, vector<8x8xbf16>
    %c0_35 = arith.constant 0 : index
    %c0_36 = arith.constant 0 : index
    %c8_37 = arith.constant 8 : index
    %48 = vector.load %arg4[%c0_35, %c0_36, %c8_37] : memref<1x8x32xbf16, #tpu.memory_space<vmem>>, vector<1x8x8xbf16>
    %49 = vector.shape_cast %48 : vector<1x8x8xbf16> to vector<8x8xbf16>
    %c0_38 = arith.constant 0 : index
    %c0_39 = arith.constant 0 : index
    %c8_40 = arith.constant 8 : index
    %50 = vector.load %arg5[%c0_38, %c0_39, %c8_40] : memref<1x8x32xbf16, #tpu.memory_space<vmem>>, vector<1x8x8xbf16>
    %51 = vector.shape_cast %50 : vector<1x8x8xbf16> to vector<8x8xbf16>
    %cst_41 = arith.constant dense<0.000000e+00> : vector<8x8xf32>
    %52 = tpu.matmul %47, %49, %cst_41 {dimension_numbers = #tpu.dot_dimension_numbers<[1], [1], [0], [0], [0, 0, 1, 0], [], []>} : vector<8x8xbf16>, vector<8x8xbf16>, vector<8x8xf32> -> vector<8x8xf32>
    %cst_42 = arith.constant -1.000000e+09 : f32
    %53 = vector.broadcast %cst_42 : f32 to vector<8x8xf32>
    %54 = arith.select %6, %52, %53 : vector<8x8xi1>, vector<8x8xf32>
    %c1_43 = arith.constant 1 : index
    %c0_44 = arith.constant 0 : index
    %c0_45 = arith.constant 0 : index
    %55 = vector.load %arg9[%c1_43, %c0_44, %c0_45] : memref<4x8x2xf32, #tpu.memory_space<vmem>>, vector<1x8x1xf32>
    %56 = vector.shape_cast %55 : vector<1x8x1xf32> to vector<8x1xf32>
    %c1_46 = arith.constant 1 : index
    %c0_47 = arith.constant 0 : index
    %c1_48 = arith.constant 1 : index
    %57 = vector.load %arg9[%c1_46, %c0_47, %c1_48] : memref<4x8x2xf32, #tpu.memory_space<vmem>>, vector<1x8x1xf32>
    %58 = vector.shape_cast %57 : vector<1x8x1xf32> to vector<8x1xf32>
    %cst_49 = arith.constant dense<0xFF800000> : vector<8xf32>
    %59 = vector.multi_reduction <maximumf>, %54, %cst_49 [1] : vector<8x8xf32> to vector<8xf32>
    %60 = vector.shape_cast %59 : vector<8xf32> to vector<8x1xf32>
    %61 = arith.maximumf %56, %60 : vector<8x1xf32>
    %62 = arith.subf %56, %61 : vector<8x1xf32>
    %63 = math.exp %62 : vector<8x1xf32>
    %64 = vector.broadcast %61 : vector<8x1xf32> to vector<8x8xf32>
    %65 = arith.subf %54, %64 : vector<8x8xf32>
    %66 = math.exp %65 : vector<8x8xf32>
    %67 = arith.mulf %63, %58 : vector<8x1xf32>
    %cst_50 = arith.constant dense<0.000000e+00> : vector<8xf32>
    %68 = vector.multi_reduction <add>, %66, %cst_50 [1] : vector<8x8xf32> to vector<8xf32>
    %69 = vector.shape_cast %68 : vector<8xf32> to vector<8x1xf32>
    %70 = arith.addf %67, %69 : vector<8x1xf32>
    %c1_51 = arith.constant 1 : index
    %c0_52 = arith.constant 0 : index
    %c1_53 = arith.constant 1 : index
    %71 = vector.load %arg9[%c1_51, %c0_52, %c1_53] : memref<4x8x2xf32, #tpu.memory_space<vmem>>, vector<1x8x1xf32>
    %72 = vector.shape_cast %71 : vector<1x8x1xf32> to vector<8x1xf32>
    %73 = vector.shape_cast %70 : vector<8x1xf32> to vector<1x8x1xf32>
    tpu.vector_store %arg9[%c1_51, %c0_52, %c1_53], %73 {strides = array<i32>} : memref<4x8x2xf32, #tpu.memory_space<vmem>>, vector<1x8x1xf32>,
    %c1_54 = arith.constant 1 : index
    %c0_55 = arith.constant 0 : index
    %c0_56 = arith.constant 0 : index
    %74 = vector.load %arg10[%c1_54, %c0_55, %c0_56] : memref<4x8x8xf32, #tpu.memory_space<vmem>>, vector<1x8x8xf32>
    %75 = vector.shape_cast %74 : vector<1x8x8xf32> to vector<8x8xf32>
    %76 = vector.broadcast %63 : vector<8x1xf32> to vector<8x8xf32>
    %77 = arith.mulf %76, %75 : vector<8x8xf32>
    %78 = arith.truncf %66 : vector<8x8xf32> to vector<8x8xbf16>
    %cst_57 = arith.constant dense<0.000000e+00> : vector<8x8xf32>
    %79 = tpu.matmul %78, %51, %cst_57 {dimension_numbers = #tpu.dot_dimension_numbers<[1], [0], [0], [1], [0, 0, 1, 1], [], []>} : vector<8x8xbf16>, vector<8x8xbf16>, vector<8x8xf32> -> vector<8x8xf32>
    %80 = arith.addf %77, %79 : vector<8x8xf32>
    %c1_58 = arith.constant 1 : index
    %c0_59 = arith.constant 0 : index
    %c0_60 = arith.constant 0 : index
    %81 = vector.load %arg10[%c1_58, %c0_59, %c0_60] : memref<4x8x8xf32, #tpu.memory_space<vmem>>, vector<1x8x8xf32>
    %82 = vector.shape_cast %81 : vector<1x8x8xf32> to vector<8x8xf32>
    %83 = vector.shape_cast %80 : vector<8x8xf32> to vector<1x8x8xf32>
    tpu.vector_store %arg10[%c1_58, %c0_59, %c0_60], %83 {strides = array<i32>} : memref<4x8x8xf32, #tpu.memory_space<vmem>>, vector<1x8x8xf32>,
    %c1_61 = arith.constant 1 : index
    %c0_62 = arith.constant 0 : index
    %c0_63 = arith.constant 0 : index
    %84 = vector.load %arg9[%c1_61, %c0_62, %c0_63] : memref<4x8x2xf32, #tpu.memory_space<vmem>>, vector<1x8x1xf32>
    %85 = vector.shape_cast %84 : vector<1x8x1xf32> to vector<8x1xf32>
    %86 = vector.shape_cast %61 : vector<8x1xf32> to vector<1x8x1xf32>
    tpu.vector_store %arg9[%c1_61, %c0_62, %c0_63], %86 {strides = array<i32>} : memref<4x8x2xf32, #tpu.memory_space<vmem>>, vector<1x8x1xf32>,
    %c0_64 = arith.constant 0 : index
    %c16 = arith.constant 16 : index
    %87 = vector.load %arg8[%c0_64, %c16] : memref<8x32xbf16, #tpu.memory_space<vmem>>, vector<8x8xbf16>
    %c0_65 = arith.constant 0 : index
    %c0_66 = arith.constant 0 : index
    %c16_67 = arith.constant 16 : index
    %88 = vector.load %arg4[%c0_65, %c0_66, %c16_67] : memref<1x8x32xbf16, #tpu.memory_space<vmem>>, vector<1x8x8xbf16>
    %89 = vector.shape_cast %88 : vector<1x8x8xbf16> to vector<8x8xbf16>
    %c0_68 = arith.constant 0 : index
    %c0_69 = arith.constant 0 : index
    %c16_70 = arith.constant 16 : index
    %90 = vector.load %arg5[%c0_68, %c0_69, %c16_70] : memref<1x8x32xbf16, #tpu.memory_space<vmem>>, vector<1x8x8xbf16>
    %91 = vector.shape_cast %90 : vector<1x8x8xbf16> to vector<8x8xbf16>
    %cst_71 = arith.constant dense<0.000000e+00> : vector<8x8xf32>
    %92 = tpu.matmul %87, %89, %cst_71 {dimension_numbers = #tpu.dot_dimension_numbers<[1], [1], [0], [0], [0, 0, 1, 0], [], []>} : vector<8x8xbf16>, vector<8x8xbf16>, vector<8x8xf32> -> vector<8x8xf32>
    %cst_72 = arith.constant -1.000000e+09 : f32
    %93 = vector.broadcast %cst_72 : f32 to vector<8x8xf32>
    %94 = arith.select %6, %92, %93 : vector<8x8xi1>, vector<8x8xf32>
    %c2 = arith.constant 2 : index
    %c0_73 = arith.constant 0 : index
    %c0_74 = arith.constant 0 : index
    %95 = vector.load %arg9[%c2, %c0_73, %c0_74] : memref<4x8x2xf32, #tpu.memory_space<vmem>>, vector<1x8x1xf32>
    %96 = vector.shape_cast %95 : vector<1x8x1xf32> to vector<8x1xf32>
    %c2_75 = arith.constant 2 : index
    %c0_76 = arith.constant 0 : index
    %c1_77 = arith.constant 1 : index
    %97 = vector.load %arg9[%c2_75, %c0_76, %c1_77] : memref<4x8x2xf32, #tpu.memory_space<vmem>>, vector<1x8x1xf32>
    %98 = vector.shape_cast %97 : vector<1x8x1xf32> to vector<8x1xf32>
    %cst_78 = arith.constant dense<0xFF800000> : vector<8xf32>
    %99 = vector.multi_reduction <maximumf>, %94, %cst_78 [1] : vector<8x8xf32> to vector<8xf32>
    %100 = vector.shape_cast %99 : vector<8xf32> to vector<8x1xf32>
    %101 = arith.maximumf %96, %100 : vector<8x1xf32>
    %102 = arith.subf %96, %101 : vector<8x1xf32>
    %103 = math.exp %102 : vector<8x1xf32>
    %104 = vector.broadcast %101 : vector<8x1xf32> to vector<8x8xf32>
    %105 = arith.subf %94, %104 : vector<8x8xf32>
    %106 = math.exp %105 : vector<8x8xf32>
    %107 = arith.mulf %103, %98 : vector<8x1xf32>
    %cst_79 = arith.constant dense<0.000000e+00> : vector<8xf32>
    %108 = vector.multi_reduction <add>, %106, %cst_79 [1] : vector<8x8xf32> to vector<8xf32>
    %109 = vector.shape_cast %108 : vector<8xf32> to vector<8x1xf32>
    %110 = arith.addf %107, %109 : vector<8x1xf32>
    %c2_80 = arith.constant 2 : index
    %c0_81 = arith.constant 0 : index
    %c1_82 = arith.constant 1 : index
    %111 = vector.load %arg9[%c2_80, %c0_81, %c1_82] : memref<4x8x2xf32, #tpu.memory_space<vmem>>, vector<1x8x1xf32>
    %112 = vector.shape_cast %111 : vector<1x8x1xf32> to vector<8x1xf32>
    %113 = vector.shape_cast %110 : vector<8x1xf32> to vector<1x8x1xf32>
    tpu.vector_store %arg9[%c2_80, %c0_81, %c1_82], %113 {strides = array<i32>} : memref<4x8x2xf32, #tpu.memory_space<vmem>>, vector<1x8x1xf32>,
    %c2_83 = arith.constant 2 : index
    %c0_84 = arith.constant 0 : index
    %c0_85 = arith.constant 0 : index
    %114 = vector.load %arg10[%c2_83, %c0_84, %c0_85] : memref<4x8x8xf32, #tpu.memory_space<vmem>>, vector<1x8x8xf32>
    %115 = vector.shape_cast %114 : vector<1x8x8xf32> to vector<8x8xf32>
    %116 = vector.broadcast %103 : vector<8x1xf32> to vector<8x8xf32>
    %117 = arith.mulf %116, %115 : vector<8x8xf32>
    %118 = arith.truncf %106 : vector<8x8xf32> to vector<8x8xbf16>
    %cst_86 = arith.constant dense<0.000000e+00> : vector<8x8xf32>
    %119 = tpu.matmul %118, %91, %cst_86 {dimension_numbers = #tpu.dot_dimension_numbers<[1], [0], [0], [1], [0, 0, 1, 1], [], []>} : vector<8x8xbf16>, vector<8x8xbf16>, vector<8x8xf32> -> vector<8x8xf32>
    %120 = arith.addf %117, %119 : vector<8x8xf32>
    %c2_87 = arith.constant 2 : index
    %c0_88 = arith.constant 0 : index
    %c0_89 = arith.constant 0 : index
    %121 = vector.load %arg10[%c2_87, %c0_88, %c0_89] : memref<4x8x8xf32, #tpu.memory_space<vmem>>, vector<1x8x8xf32>
    %122 = vector.shape_cast %121 : vector<1x8x8xf32> to vector<8x8xf32>
    %123 = vector.shape_cast %120 : vector<8x8xf32> to vector<1x8x8xf32>
    tpu.vector_store %arg10[%c2_87, %c0_88, %c0_89], %123 {strides = array<i32>} : memref<4x8x8xf32, #tpu.memory_space<vmem>>, vector<1x8x8xf32>,
    %c2_90 = arith.constant 2 : index
    %c0_91 = arith.constant 0 : index
    %c0_92 = arith.constant 0 : index
    %124 = vector.load %arg9[%c2_90, %c0_91, %c0_92] : memref<4x8x2xf32, #tpu.memory_space<vmem>>, vector<1x8x1xf32>
    %125 = vector.shape_cast %124 : vector<1x8x1xf32> to vector<8x1xf32>
    %126 = vector.shape_cast %101 : vector<8x1xf32> to vector<1x8x1xf32>
    tpu.vector_store %arg9[%c2_90, %c0_91, %c0_92], %126 {strides = array<i32>} : memref<4x8x2xf32, #tpu.memory_space<vmem>>, vector<1x8x1xf32>,
    %c0_93 = arith.constant 0 : index
    %c24 = arith.constant 24 : index
    %127 = vector.load %arg8[%c0_93, %c24] : memref<8x32xbf16, #tpu.memory_space<vmem>>, vector<8x8xbf16>
    %c0_94 = arith.constant 0 : index
    %c0_95 = arith.constant 0 : index
    %c24_96 = arith.constant 24 : index
    %128 = vector.load %arg4[%c0_94, %c0_95, %c24_96] : memref<1x8x32xbf16, #tpu.memory_space<vmem>>, vector<1x8x8xbf16>
    %129 = vector.shape_cast %128 : vector<1x8x8xbf16> to vector<8x8xbf16>
    %c0_97 = arith.constant 0 : index
    %c0_98 = arith.constant 0 : index
    %c24_99 = arith.constant 24 : index
    %130 = vector.load %arg5[%c0_97, %c0_98, %c24_99] : memref<1x8x32xbf16, #tpu.memory_space<vmem>>, vector<1x8x8xbf16>
    %131 = vector.shape_cast %130 : vector<1x8x8xbf16> to vector<8x8xbf16>
    %cst_100 = arith.constant dense<0.000000e+00> : vector<8x8xf32>
    %132 = tpu.matmul %127, %129, %cst_100 {dimension_numbers = #tpu.dot_dimension_numbers<[1], [1], [0], [0], [0, 0, 1, 0], [], []>} : vector<8x8xbf16>, vector<8x8xbf16>, vector<8x8xf32> -> vector<8x8xf32>
    %cst_101 = arith.constant -1.000000e+09 : f32
    %133 = vector.broadcast %cst_101 : f32 to vector<8x8xf32>
    %134 = arith.select %6, %132, %133 : vector<8x8xi1>, vector<8x8xf32>
    %c3 = arith.constant 3 : index
    %c0_102 = arith.constant 0 : index
    %c0_103 = arith.constant 0 : index
    %135 = vector.load %arg9[%c3, %c0_102, %c0_103] : memref<4x8x2xf32, #tpu.memory_space<vmem>>, vector<1x8x1xf32>
    %136 = vector.shape_cast %135 : vector<1x8x1xf32> to vector<8x1xf32>
    %c3_104 = arith.constant 3 : index
    %c0_105 = arith.constant 0 : index
    %c1_106 = arith.constant 1 : index
    %137 = vector.load %arg9[%c3_104, %c0_105, %c1_106] : memref<4x8x2xf32, #tpu.memory_space<vmem>>, vector<1x8x1xf32>
    %138 = vector.shape_cast %137 : vector<1x8x1xf32> to vector<8x1xf32>
    %cst_107 = arith.constant dense<0xFF800000> : vector<8xf32>
    %139 = vector.multi_reduction <maximumf>, %134, %cst_107 [1] : vector<8x8xf32> to vector<8xf32>
    %140 = vector.shape_cast %139 : vector<8xf32> to vector<8x1xf32>
    %141 = arith.maximumf %136, %140 : vector<8x1xf32>
    %142 = arith.subf %136, %141 : vector<8x1xf32>
    %143 = math.exp %142 : vector<8x1xf32>
    %144 = vector.broadcast %141 : vector<8x1xf32> to vector<8x8xf32>
    %145 = arith.subf %134, %144 : vector<8x8xf32>
    %146 = math.exp %145 : vector<8x8xf32>
    %147 = arith.mulf %143, %138 : vector<8x1xf32>
    %cst_108 = arith.constant dense<0.000000e+00> : vector<8xf32>
    %148 = vector.multi_reduction <add>, %146, %cst_108 [1] : vector<8x8xf32> to vector<8xf32>
    %149 = vector.shape_cast %148 : vector<8xf32> to vector<8x1xf32>
    %150 = arith.addf %147, %149 : vector<8x1xf32>
    %c3_109 = arith.constant 3 : index
    %c0_110 = arith.constant 0 : index
    %c1_111 = arith.constant 1 : index
    %151 = vector.load %arg9[%c3_109, %c0_110, %c1_111] : memref<4x8x2xf32, #tpu.memory_space<vmem>>, vector<1x8x1xf32>
    %152 = vector.shape_cast %151 : vector<1x8x1xf32> to vector<8x1xf32>
    %153 = vector.shape_cast %150 : vector<8x1xf32> to vector<1x8x1xf32>
    tpu.vector_store %arg9[%c3_109, %c0_110, %c1_111], %153 {strides = array<i32>} : memref<4x8x2xf32, #tpu.memory_space<vmem>>, vector<1x8x1xf32>,
    %c3_112 = arith.constant 3 : index
    %c0_113 = arith.constant 0 : index
    %c0_114 = arith.constant 0 : index
    %154 = vector.load %arg10[%c3_112, %c0_113, %c0_114] : memref<4x8x8xf32, #tpu.memory_space<vmem>>, vector<1x8x8xf32>
    %155 = vector.shape_cast %154 : vector<1x8x8xf32> to vector<8x8xf32>
    %156 = vector.broadcast %143 : vector<8x1xf32> to vector<8x8xf32>
    %157 = arith.mulf %156, %155 : vector<8x8xf32>
    %158 = arith.truncf %146 : vector<8x8xf32> to vector<8x8xbf16>
    %cst_115 = arith.constant dense<0.000000e+00> : vector<8x8xf32>
    %159 = tpu.matmul %158, %131, %cst_115 {dimension_numbers = #tpu.dot_dimension_numbers<[1], [0], [0], [1], [0, 0, 1, 1], [], []>} : vector<8x8xbf16>, vector<8x8xbf16>, vector<8x8xf32> -> vector<8x8xf32>
    %160 = arith.addf %157, %159 : vector<8x8xf32>
    %c3_116 = arith.constant 3 : index
    %c0_117 = arith.constant 0 : index
    %c0_118 = arith.constant 0 : index
    %161 = vector.load %arg10[%c3_116, %c0_117, %c0_118] : memref<4x8x8xf32, #tpu.memory_space<vmem>>, vector<1x8x8xf32>
    %162 = vector.shape_cast %161 : vector<1x8x8xf32> to vector<8x8xf32>
    %163 = vector.shape_cast %160 : vector<8x8xf32> to vector<1x8x8xf32>
    tpu.vector_store %arg10[%c3_116, %c0_117, %c0_118], %163 {strides = array<i32>} : memref<4x8x8xf32, #tpu.memory_space<vmem>>, vector<1x8x8xf32>,
    %c3_119 = arith.constant 3 : index
    %c0_120 = arith.constant 0 : index
    %c0_121 = arith.constant 0 : index
    %164 = vector.load %arg9[%c3_119, %c0_120, %c0_121] : memref<4x8x2xf32, #tpu.memory_space<vmem>>, vector<1x8x1xf32>
    %165 = vector.shape_cast %164 : vector<1x8x1xf32> to vector<8x1xf32>
    %166 = vector.shape_cast %141 : vector<8x1xf32> to vector<1x8x1xf32>
    tpu.vector_store %arg9[%c3_119, %c0_120, %c0_121], %166 {strides = array<i32>} : memref<4x8x2xf32, #tpu.memory_space<vmem>>, vector<1x8x1xf32>,
    %c0_i32_122 = arith.constant 0 : i32
    %167 = arith.cmpi eq, %arg2, %c0_i32_122 : i32
    %168 = arith.extui %167 : i1 to i32
    %c0_i32_123 = arith.constant 0 : i32
    %169 = arith.cmpi ne, %168, %c0_i32_123 : i32
    scf.if %169 {
      %c0_124 = arith.constant 0 : index
      %c0_125 = arith.constant 0 : index
      %c1_126 = arith.constant 1 : index
      %170 = vector.load %arg9[%c0_124, %c0_125, %c1_126] : memref<4x8x2xf32, #tpu.memory_space<vmem>>, vector<1x8x1xf32>
      %171 = vector.shape_cast %170 : vector<1x8x1xf32> to vector<8x1xf32>
      %172 = tpu.reciprocal %171 {approx = true} : vector<8x1xf32> -> vector<8x1xf32>
      %c0_127 = arith.constant 0 : index
      %c0_128 = arith.constant 0 : index
      %c0_129 = arith.constant 0 : index
      %173 = vector.load %arg10[%c0_127, %c0_128, %c0_129] : memref<4x8x8xf32, #tpu.memory_space<vmem>>, vector<1x8x8xf32>
      %174 = vector.shape_cast %173 : vector<1x8x8xf32> to vector<8x8xf32>
      %175 = vector.broadcast %172 : vector<8x1xf32> to vector<8x8xf32>
      %176 = arith.mulf %174, %175 : vector<8x8xf32>
      %c0_130 = arith.constant 0 : index
      %c0_131 = arith.constant 0 : index
      %c0_132 = arith.constant 0 : index
      %177 = vector.load %arg7[%c0_130, %c0_131, %c0_132] : memref<1x8x32xf32, #tpu.memory_space<vmem>>, vector<1x8x8xf32>
      %178 = vector.shape_cast %177 : vector<1x8x8xf32> to vector<8x8xf32>
      %179 = vector.shape_cast %176 : vector<8x8xf32> to vector<1x8x8xf32>
      tpu.vector_store %arg7[%c0_130, %c0_131, %c0_132], %179 {strides = array<i32>} : memref<1x8x32xf32, #tpu.memory_space<vmem>>, vector<1x8x8xf32>,
      %c1_133 = arith.constant 1 : index
      %c0_134 = arith.constant 0 : index
      %c1_135 = arith.constant 1 : index
      %180 = vector.load %arg9[%c1_133, %c0_134, %c1_135] : memref<4x8x2xf32, #tpu.memory_space<vmem>>, vector<1x8x1xf32>
      %181 = vector.shape_cast %180 : vector<1x8x1xf32> to vector<8x1xf32>
      %182 = tpu.reciprocal %181 {approx = true} : vector<8x1xf32> -> vector<8x1xf32>
      %c1_136 = arith.constant 1 : index
      %c0_137 = arith.constant 0 : index
      %c0_138 = arith.constant 0 : index
      %183 = vector.load %arg10[%c1_136, %c0_137, %c0_138] : memref<4x8x8xf32, #tpu.memory_space<vmem>>, vector<1x8x8xf32>
      %184 = vector.shape_cast %183 : vector<1x8x8xf32> to vector<8x8xf32>
      %185 = vector.broadcast %182 : vector<8x1xf32> to vector<8x8xf32>
      %186 = arith.mulf %184, %185 : vector<8x8xf32>
      %c0_139 = arith.constant 0 : index
      %c0_140 = arith.constant 0 : index
      %c8_141 = arith.constant 8 : index
      %187 = vector.load %arg7[%c0_139, %c0_140, %c8_141] : memref<1x8x32xf32, #tpu.memory_space<vmem>>, vector<1x8x8xf32>
      %188 = vector.shape_cast %187 : vector<1x8x8xf32> to vector<8x8xf32>
      %189 = vector.shape_cast %186 : vector<8x8xf32> to vector<1x8x8xf32>
      tpu.vector_store %arg7[%c0_139, %c0_140, %c8_141], %189 {strides = array<i32>} : memref<1x8x32xf32, #tpu.memory_space<vmem>>, vector<1x8x8xf32>,
      %c2_142 = arith.constant 2 : index
      %c0_143 = arith.constant 0 : index
      %c1_144 = arith.constant 1 : index
      %190 = vector.load %arg9[%c2_142, %c0_143, %c1_144] : memref<4x8x2xf32, #tpu.memory_space<vmem>>, vector<1x8x1xf32>
      %191 = vector.shape_cast %190 : vector<1x8x1xf32> to vector<8x1xf32>
      %192 = tpu.reciprocal %191 {approx = true} : vector<8x1xf32> -> vector<8x1xf32>
      %c2_145 = arith.constant 2 : index
      %c0_146 = arith.constant 0 : index
      %c0_147 = arith.constant 0 : index
      %193 = vector.load %arg10[%c2_145, %c0_146, %c0_147] : memref<4x8x8xf32, #tpu.memory_space<vmem>>, vector<1x8x8xf32>
      %194 = vector.shape_cast %193 : vector<1x8x8xf32> to vector<8x8xf32>
      %195 = vector.broadcast %192 : vector<8x1xf32> to vector<8x8xf32>
      %196 = arith.mulf %194, %195 : vector<8x8xf32>
      %c0_148 = arith.constant 0 : index
      %c0_149 = arith.constant 0 : index
      %c16_150 = arith.constant 16 : index
      %197 = vector.load %arg7[%c0_148, %c0_149, %c16_150] : memref<1x8x32xf32, #tpu.memory_space<vmem>>, vector<1x8x8xf32>
      %198 = vector.shape_cast %197 : vector<1x8x8xf32> to vector<8x8xf32>
      %199 = vector.shape_cast %196 : vector<8x8xf32> to vector<1x8x8xf32>
      tpu.vector_store %arg7[%c0_148, %c0_149, %c16_150], %199 {strides = array<i32>} : memref<1x8x32xf32, #tpu.memory_space<vmem>>, vector<1x8x8xf32>,
      %c3_151 = arith.constant 3 : index
      %c0_152 = arith.constant 0 : index
      %c1_153 = arith.constant 1 : index
      %200 = vector.load %arg9[%c3_151, %c0_152, %c1_153] : memref<4x8x2xf32, #tpu.memory_space<vmem>>, vector<1x8x1xf32>
      %201 = vector.shape_cast %200 : vector<1x8x1xf32> to vector<8x1xf32>
      %202 = tpu.reciprocal %201 {approx = true} : vector<8x1xf32> -> vector<8x1xf32>
      %c3_154 = arith.constant 3 : index
      %c0_155 = arith.constant 0 : index
      %c0_156 = arith.constant 0 : index
      %203 = vector.load %arg10[%c3_154, %c0_155, %c0_156] : memref<4x8x8xf32, #tpu.memory_space<vmem>>, vector<1x8x8xf32>
      %204 = vector.shape_cast %203 : vector<1x8x8xf32> to vector<8x8xf32>
      %205 = vector.broadcast %202 : vector<8x1xf32> to vector<8x8xf32>
      %206 = arith.mulf %204, %205 : vector<8x8xf32>
      %c0_157 = arith.constant 0 : index
      %c0_158 = arith.constant 0 : index
      %c24_159 = arith.constant 24 : index
      %207 = vector.load %arg7[%c0_157, %c0_158, %c24_159] : memref<1x8x32xf32, #tpu.memory_space<vmem>>, vector<1x8x8xf32>
      %208 = vector.shape_cast %207 : vector<1x8x8xf32> to vector<8x8xf32>
      %209 = vector.shape_cast %206 : vector<8x8xf32> to vector<1x8x8xf32>
      tpu.vector_store %arg7[%c0_157, %c0_158, %c24_159], %209 {strides = array<i32>} : memref<1x8x32xf32, #tpu.memory_space<vmem>>, vector<1x8x8xf32>,
    } else {
    }
    return
  }
  func.func @transform_0(%arg0: i32, %arg1: i32, %arg2: i32) -> (i32, i32, i32) {
    %c0_i32 = arith.constant 0 : i32
    %c0_i32_0 = arith.constant 0 : i32
    return %arg0, %arg1, %c0_i32 : i32, i32, i32
  }
  func.func @transform_1(%arg0: i32, %arg1: i32, %arg2: i32) -> (i32, i32, i32) {
    %c0_i32 = arith.constant 0 : i32
    %c0_i32_0 = arith.constant 0 : i32
    return %arg0, %arg2, %c0_i32 : i32, i32, i32
  }
  func.func @transform_2(%arg0: i32, %arg1: i32, %arg2: i32) -> (i32, i32, i32) {
    %c0_i32 = arith.constant 0 : i32
    %c0_i32_0 = arith.constant 0 : i32
    return %arg0, %arg2, %c0_i32 : i32, i32, i32
  }
  func.func @transform_3(%arg0: i32, %arg1: i32, %arg2: i32) -> (i32, i32, i32, i32) {
    %c0_i32 = arith.constant 0 : i32
    %c0_i32_0 = arith.constant 0 : i32
    return %arg0, %c0_i32, %arg1, %arg2 : i32, i32, i32, i32
  }
  func.func @transform_4(%arg0: i32, %arg1: i32, %arg2: i32) -> (i32, i32, i32) {
    %c0_i32 = arith.constant 0 : i32
    %c0_i32_0 = arith.constant 0 : i32
    return %arg0, %arg1, %c0_i32 : i32, i32, i32
  }
}

</mosaic_0001>

<llo_original>
// kernel: tpu_custom_call.1
$region0: #{tpu_custom_call.1}
  #allocation0 [shape = 'u32[]', space=smem, size = 0x4, offset = 0x4, fixed_abs, tag = 'smem constant byte address 0x4 - core index']
  #allocation1 [shape = 'u32[144,128]{1,0:T(1,128)}', space=vmem, size = 0x12000, scoped, tag = 'internal scratch']
  #allocation2 [shape = 'bf16[8,32]{1,0:T(8,128)(2,1)}', space=vmem, size = 0x800, scoped, tag = 'scratch operand']
  #allocation3 [shape = 'f32[4,8,2]{2,1,0:T(8,128)}', space=vmem, size = 0x4000, scoped, tag = 'scratch operand']
  #allocation4 [shape = 'f32[4,8,8]{2,1,0:T(8,128)}', space=vmem, size = 0x4000, scoped, tag = 'scratch operand']
  %s0 = inlined_call_operand.hbm [shape: bf16[2,8,32], index: 0, kind: input, shape index: {}]
  %s1 = inlined_call_operand.hbm [shape: bf16[2,8,32], index: 1, kind: input, shape index: {}]
  %s2 = inlined_call_operand.hbm [shape: bf16[2,8,32], index: 2, kind: input, shape index: {}]
  %s3 = inlined_call_operand.hbm [shape: s32[2,1,8,8], index: 3, kind: input, shape index: {}]
  %s4 = inlined_call_operand.hbm [shape: f32[2,8,32], index: 4, kind: output, shape index: {}]
  %s5 = sld [smem:[#allocation0]]
  $region73: #{tpu_custom_call.1} parent=0
    _
  %s7 = ssub.s32 1, %s5
  %s8 = scalar_select 0, %s7, %s5
  $region1: #{tpu_custom_call.1} parent=0
    #allocation5 [shape = 'u8[4096]{0}', space=vmem, size = 0x1000, scoped, tag = 'input window, operand 0']
    #allocation6 [shape = 's32[2]{0}', space=sflag, size = 0x8, scoped, tag = 'scoped memory for tpu_custom_call.1']
    #allocation7 [shape = 's32[2]{0}', space=sflag, size = 0x8, scoped, tag = 'scoped memory for tpu_custom_call.1']
    #allocation8 [shape = 'u8[4096]{0}', space=vmem, size = 0x1000, scoped, tag = 'input window, operand 1']
    #allocation9 [shape = 's32[2]{0}', space=sflag, size = 0x8, scoped, tag = 'scoped memory for tpu_custom_call.1']
    #allocation10 [shape = 'u8[4096]{0}', space=vmem, size = 0x1000, scoped, tag = 'input window, operand 2']
    #allocation11 [shape = 'u8[8192]{0}', space=vmem, size = 0x2000, scoped, tag = 'input window, operand 3']
    #allocation12 [shape = 's32[2]{0}', space=sflag, size = 0x8, scoped, tag = 'scoped memory for tpu_custom_call.1']
    #allocation13 [shape = 'u8[8192]{0}', space=vmem, size = 0x2000, scoped, tag = 'output window, operand 0']
    %9 = vsyncpa [#allocation6], 0
    %s10 = scalar_lea.sflag [#allocation6], 1
    %11 = vsyncpa %s10, 0
    %12 = vsyncpa [#allocation9], 0
    %s13 = scalar_lea.sflag [#allocation9], 1
    %14 = vsyncpa %s13, 0
    %15 = vsyncpa [#allocation12], 0
    %s16 = scalar_lea.sflag [#allocation12], 1
    %17 = vsyncpa %s16, 0
    %18 = vsyncpa [#allocation7], 0
    %s19 = scalar_lea.sflag [#allocation7], 1
    %20 = vsyncpa %s19, 0
    loop: start=0, step=1, limit=4
    $region2: #{tpu_custom_call.1} parent=1 // loop_pre_header
      _
    $region3: #{tpu_custom_call.1} parent=1 // loop_header
      %s22 = sphi 0, %s26
      %p23 = scmp.ge.s32.totalorder %s22, 4
      %s29 = sphi 0, %s48
      %s30 = sphi 0, %s44
      %s31 = sphi 0, %s40
      %s32 = sphi 0, %s29
      %s33 = sphi 0, %s30
      %s34 = sphi 0, %s31
      %s35 = sphi 0, %s32
      %s36 = sphi 0, %s33
      %s37 = sphi 0, %s34
      %s53 = sphi 0, %s55
      %s56 = sphi 0, %s53
      %s57 = sphi 0, %s56
      %s73 = sphi 0, %s57
      %s81 = sphi 0, %s83
      %s84 = sphi 0, %s81
      %s85 = sphi 0, %s84
      %s101 = sphi 0, %s85
      %s109 = sphi 0, %s111
      %s112 = sphi 0, %s109
      %s113 = sphi 0, %s112
      %s129 = sphi 0, %s113
      %s139 = sphi 0, %s141
      %s142 = sphi 0, %s139
      %s143 = sphi 0, %s142
      %s159 = sphi 0, %s143
      %s167 = sphi 0, %s169
      %s170 = sphi 0, %s167
      %s171 = sphi 0, %s170
      %s187 = sphi 0, %s171
    $region4: #{tpu_custom_call.1} parent=1 // loop_header_branch
      %25 = sbr.rel (%p23) target = $region8
    $region5: #{tpu_custom_call.1} parent=1 // loop_body
      %s27 = ssub.s32 %s22, 1
      %s28 = ssub.s32 %s22, 2
      %s38 = sadd.s32 1, %s31
      %p39 = scmp.ge.s32.totalorder %s38, 1
      %s40 = scalar_select %p39, 0, %s38
      %s41 = sadd.s32 1, %s30
      %s42 = scalar_select %p39, %s41, %s30
      %p43 = scmp.ge.s32.totalorder %s42, 1
      %s44 = scalar_select %p43, 0, %s42
      %s45 = sadd.s32 1, %s29
      %s46 = scalar_select %p43, %s45, %s29
      %p47 = scmp.ge.s32.totalorder %s46, 2
      %s48 = scalar_select %p47, 0, %s46
      %s49 = ssub.s32 %s29, %s48
      %s50 = ssub.s32 %s30, %s44
      %s51 = sor.u32 %s49, %s50
      %p52 = scmp.eq.s32.totalorder %s51, 0
      %s54 = sadd.s32 %s53, 1
      %s55 = scalar_select %p52, %s53, %s54
      %p58 = pneg %p52
      %p59 = scmp.eq.s32.totalorder %s22, 1
      %p60 = por %p58, %p59
      %p61 = scmp.ne.s32.totalorder %s53, %s56
      %p62 = scmp.eq.s32.totalorder %s22, 0
      %p63 = por %p61, %p62
      %p64 = scmp.ne.s32.totalorder %s53, %s56
      %p65 = scmp.eq.s32.totalorder %s27, 1
      %p66 = por %p64, %p65
      %p67 = scmp.ne.s32.totalorder %s56, %s57
      %p68 = scmp.eq.s32.totalorder %s27, 0
      %p69 = por %p67, %p68
      %p70 = scmp.ne.s32.totalorder %s56, %s57
      %p71 = scmp.eq.s32.totalorder %s28, 1
      %p72 = por %p70, %p71
      %p74 = scmp.ne.s32.totalorder %s57, %s73
      %p75 = scmp.eq.s32.totalorder %s28, 0
      %p76 = por %p74, %p75
      %s77 = ssub.s32 %s29, %s48
      %s78 = ssub.s32 %s31, %s40
      %s79 = sor.u32 %s77, %s78
      %p80 = scmp.eq.s32.totalorder %s79, 0
      %s82 = sadd.s32 %s81, 1
      %s83 = scalar_select %p80, %s81, %s82
      %p86 = pneg %p80
      %p87 = scmp.eq.s32.totalorder %s22, 1
      %p88 = por %p86, %p87
      %p89 = scmp.ne.s32.totalorder %s81, %s84
      %p90 = scmp.eq.s32.totalorder %s22, 0
      %p91 = por %p89, %p90
      %p92 = scmp.ne.s32.totalorder %s81, %s84
      %p93 = scmp.eq.s32.totalorder %s27, 1
      %p94 = por %p92, %p93
      %p95 = scmp.ne.s32.totalorder %s84, %s85
      %p96 = scmp.eq.s32.totalorder %s27, 0
      %p97 = por %p95, %p96
      %p98 = scmp.ne.s32.totalorder %s84, %s85
      %p99 = scmp.eq.s32.totalorder %s28, 1
      %p100 = por %p98, %p99
      %p102 = scmp.ne.s32.totalorder %s85, %s101
      %p103 = scmp.eq.s32.totalorder %s28, 0
      %p104 = por %p102, %p103
      %s105 = ssub.s32 %s29, %s48
      %s106 = ssub.s32 %s31, %s40
      %s107 = sor.u32 %s105, %s106
      %p108 = scmp.eq.s32.totalorder %s107, 0
      %s110 = sadd.s32 %s109, 1
      %s111 = scalar_select %p108, %s109, %s110
      %p114 = pneg %p108
      %p115 = scmp.eq.s32.totalorder %s22, 1
      %p116 = por %p114, %p115
      %p117 = scmp.ne.s32.totalorder %s109, %s112
      %p118 = scmp.eq.s32.totalorder %s22, 0
      %p119 = por %p117, %p118
      %p120 = scmp.ne.s32.totalorder %s109, %s112
      %p121 = scmp.eq.s32.totalorder %s27, 1
      %p122 = por %p120, %p121
      %p123 = scmp.ne.s32.totalorder %s112, %s113
      %p124 = scmp.eq.s32.totalorder %s27, 0
      %p125 = por %p123, %p124
      %p126 = scmp.ne.s32.totalorder %s112, %s113
      %p127 = scmp.eq.s32.totalorder %s28, 1
      %p128 = por %p126, %p127
      %p130 = scmp.ne.s32.totalorder %s113, %s129
      %p131 = scmp.eq.s32.totalorder %s28, 0
      %p132 = por %p130, %p131
      %s133 = ssub.s32 %s29, %s48
      %s134 = ssub.s32 %s30, %s44
      %s135 = sor.u32 %s133, %s134
      %s136 = ssub.s32 %s31, %s40
      %s137 = sor.u32 %s135, %s136
      %p138 = scmp.eq.s32.totalorder %s137, 0
      %s140 = sadd.s32 %s139, 1
      %s141 = scalar_select %p138, %s139, %s140
      %p144 = pneg %p138
      %p145 = scmp.eq.s32.totalorder %s22, 1
      %p146 = por %p144, %p145
      %p147 = scmp.ne.s32.totalorder %s139, %s142
      %p148 = scmp.eq.s32.totalorder %s22, 0
      %p149 = por %p147, %p148
      %p150 = scmp.ne.s32.totalorder %s139, %s142
      %p151 = scmp.eq.s32.totalorder %s27, 1
      %p152 = por %p150, %p151
      %p153 = scmp.ne.s32.totalorder %s142, %s143
      %p154 = scmp.eq.s32.totalorder %s27, 0
      %p155 = por %p153, %p154
      %p156 = scmp.ne.s32.totalorder %s142, %s143
      %p157 = scmp.eq.s32.totalorder %s28, 1
      %p158 = por %p156, %p157
      %p160 = scmp.ne.s32.totalorder %s143, %s159
      %p161 = scmp.eq.s32.totalorder %s28, 0
      %p162 = por %p160, %p161
      %s163 = ssub.s32 %s29, %s48
      %s164 = ssub.s32 %s30, %s44
      %s165 = sor.u32 %s163, %s164
      %p166 = scmp.eq.s32.totalorder %s165, 0
      %s168 = sadd.s32 %s167, 1
      %s169 = scalar_select %p166, %s167, %s168
      %p172 = pneg %p166
      %p173 = scmp.eq.s32.totalorder %s22, 1
      %p174 = por %p172, %p173
      %p175 = scmp.ne.s32.totalorder %s167, %s170
      %p176 = scmp.eq.s32.totalorder %s22, 0
      %p177 = por %p175, %p176
      %p178 = scmp.ne.s32.totalorder %s167, %s170
      %p179 = scmp.eq.s32.totalorder %s27, 1
      %p180 = por %p178, %p179
      %p181 = scmp.ne.s32.totalorder %s170, %s171
      %p182 = scmp.eq.s32.totalorder %s27, 0
      %p183 = por %p181, %p182
      %p184 = scmp.ne.s32.totalorder %s170, %s171
      %p185 = scmp.eq.s32.totalorder %s28, 1
      %p186 = por %p184, %p185
      %p188 = scmp.ne.s32.totalorder %s171, %s187
      %p189 = scmp.eq.s32.totalorder %s28, 0
      %p190 = por %p188, %p189
      %p191 = scmp.le.s32.totalorder 1, %s22
      %p192 = scmp.lt.s32.totalorder %s22, 3
      %p193 = pnand %p191, %p192
      %p194 = pneg %p193
      // Predicated region
      $region9: #{tpu_custom_call.1} parent=5 // pred_check
        _
      $region10: #{tpu_custom_call.1} parent=5 // pred_check_branch
        %196 = sbr.rel (%p193) target = $region12
      $region11: #{tpu_custom_call.1} parent=5 // pred_region
        %s197 = ssub.s32 %s22, 1
      $region12: #{tpu_custom_call.1} parent=5 // pred_fallthru
        _
      %p198 = scmp.lt.s32.totalorder %s22, 2
      // Predicated region
      $region13: #{tpu_custom_call.1} parent=5 // pred_check
        %p199 = pneg %p198
      $region14: #{tpu_custom_call.1} parent=5 // pred_check_branch
        %201 = sbr.rel (%p199) target = $region16
      $region15: #{tpu_custom_call.1} parent=5 // pred_region
        // Predicated region
        $region17: #{tpu_custom_call.1} parent=15 // pred_check
          %p202 = pneg %p63
        $region18: #{tpu_custom_call.1} parent=15 // pred_check_branch
          %204 = sbr.rel (%p202) target = $region20
        $region19: #{tpu_custom_call.1} parent=15 // pred_region
          %s205 = sand.u32 %s53, 1
          %s206 = scalar_lea.sflag [#allocation6], %s205
          %s207 = sand.u32 %s53, 1
          %s208 = smul.addr %s207, 4
          %s209 = scalar_lea.vmem [#allocation5], %s208
          %s211 = ssub.s32 64, 64
          %212 = vsyncadd %s206, %s211
          %s213 = sadd.s32 %s30, %s29
          %s214 = smul.addr %s213, 64
          %s215 = scalar_lea.hbm %s0, %s214
          %s217 = sshll.u32 %s209, 4
          %s218 = int_to_ptr.vmem [resolvable:$true] %s217
          %220 = dma.hbm_to_vmem [thread:$0]  %s215, 64, %s218, %s206
        $region20: #{tpu_custom_call.1} parent=15 // pred_fallthru
          _
        // Predicated region
        $region21: #{tpu_custom_call.1} parent=15 // pred_check
          %p221 = pneg %p91
        $region22: #{tpu_custom_call.1} parent=15 // pred_check_branch
          %223 = sbr.rel (%p221) target = $region24
        $region23: #{tpu_custom_call.1} parent=15 // pred_region
          %s224 = sand.u32 %s22, 1
          %s225 = scalar_lea.sflag [#allocation9], %s224
          %s226 = sand.u32 %s81, 1
          %s227 = smul.addr %s226, 4
          %s228 = scalar_lea.vmem [#allocation8], %s227
          %s230 = ssub.s32 64, 64
          %231 = vsyncadd %s225, %s230
          %s232 = sadd.s32 %s31, %s29
          %s233 = smul.addr %s232, 64
          %s234 = scalar_lea.hbm %s1, %s233
          %s236 = sshll.u32 %s228, 4
          %s237 = int_to_ptr.vmem [resolvable:$true] %s236
          %239 = dma.hbm_to_vmem [thread:$0]  %s234, 64, %s237, %s225
        $region24: #{tpu_custom_call.1} parent=15 // pred_fallthru
          _
        // Predicated region
        $region25: #{tpu_custom_call.1} parent=15 // pred_check
          %p240 = pneg %p119
        $region26: #{tpu_custom_call.1} parent=15 // pred_check_branch
          %242 = sbr.rel (%p240) target = $region28
        $region27: #{tpu_custom_call.1} parent=15 // pred_region
          %s243 = sand.u32 %s22, 1
          %s244 = scalar_lea.sflag [#allocation9], %s243
          %s245 = sand.u32 %s109, 1
          %s246 = smul.addr %s245, 4
          %s247 = scalar_lea.vmem [#allocation10], %s246
          %s249 = ssub.s32 64, 64
          %250 = vsyncadd %s244, %s249
          %s251 = sadd.s32 %s31, %s29
          %s252 = smul.addr %s251, 64
          %s253 = scalar_lea.hbm %s2, %s252
          %s255 = sshll.u32 %s247, 4
          %s256 = int_to_ptr.vmem [resolvable:$true] %s255
          %258 = dma.hbm_to_vmem [thread:$0]  %s253, 64, %s256, %s244
        $region28: #{tpu_custom_call.1} parent=15 // pred_fallthru
          _
        // Predicated region
        $region29: #{tpu_custom_call.1} parent=15 // pred_check
          %p259 = pneg %p149
        $region30: #{tpu_custom_call.1} parent=15 // pred_check_branch
          %261 = sbr.rel (%p259) target = $region32
        $region31: #{tpu_custom_call.1} parent=15 // pred_region
          %s262 = sand.u32 %s139, 1
          %s263 = scalar_lea.sflag [#allocation12], %s262
          %s264 = sand.u32 %s139, 1
          %s265 = smul.addr %s264, 8
          %s266 = scalar_lea.vmem [#allocation11], %s265
          %s268 = ssub.s32 128, 128
          %269 = vsyncadd %s263, %s268
          %s270 = sadd.s32 %s31, %s30
          %s271 = sadd.s32 %s270, %s29
          %s272 = smul.addr %s271, 128
          %s273 = scalar_lea.hbm %s3, %s272
          %s275 = sshll.u32 %s266, 4
          %s276 = int_to_ptr.vmem [resolvable:$true] %s275
          %278 = dma.hbm_to_vmem [thread:$0]  %s273, 128, %s276, %s263
        $region32: #{tpu_custom_call.1} parent=15 // pred_fallthru
          _
      $region16: #{tpu_custom_call.1} parent=5 // pred_fallthru
        _
      %p279 = scmp.le.s32.totalorder 1, %s22
      %p280 = scmp.lt.s32.totalorder %s22, 3
      %p281 = pnand %p279, %p280
      %p282 = pneg %p281
      // Predicated region
      $region33: #{tpu_custom_call.1} parent=5 // pred_check
        _
      $region34: #{tpu_custom_call.1} parent=5 // pred_check_branch
        %284 = sbr.rel (%p281) target = $region36
      $region35: #{tpu_custom_call.1} parent=5 // pred_region
        %s285 = ssub.s32 %s22, 1
        %s286 = sand.u32 %s56, 1
        %s287 = scalar_lea.sflag [#allocation6], %s286
        %s288 = sand.u32 %s56, 1
        %s289 = smul.addr %s288, 4
        %s290 = scalar_lea.vmem [#allocation5], %s289
        // Predicated region
        $region37: #{tpu_custom_call.1} parent=35 // pred_check
          %p291 = pneg %p69
        $region38: #{tpu_custom_call.1} parent=35 // pred_check_branch
          %293 = sbr.rel (%p291) target = $region40
        $region39: #{tpu_custom_call.1} parent=35 // pred_region
          %294 = dma.done %s287, 64
        $region40: #{tpu_custom_call.1} parent=35 // pred_fallthru
          _
        %s295 = sand.u32 %s27, 1
        %s296 = scalar_lea.sflag [#allocation9], %s295
        %s297 = sand.u32 %s84, 1
        %s298 = smul.addr %s297, 4
        %s299 = scalar_lea.vmem [#allocation8], %s298
        // Predicated region
        $region41: #{tpu_custom_call.1} parent=35 // pred_check
          %p300 = pneg %p97
        $region42: #{tpu_custom_call.1} parent=35 // pred_check_branch
          %302 = sbr.rel (%p300) target = $region44
        $region43: #{tpu_custom_call.1} parent=35 // pred_region
          %303 = dma.done %s296, 64
        $region44: #{tpu_custom_call.1} parent=35 // pred_fallthru
          _
        %s304 = sand.u32 %s27, 1
        %s305 = scalar_lea.sflag [#allocation9], %s304
        %s306 = sand.u32 %s112, 1
        %s307 = smul.addr %s306, 4
        %s308 = scalar_lea.vmem [#allocation10], %s307
        // Predicated region
        $region45: #{tpu_custom_call.1} parent=35 // pred_check
          %p309 = pneg %p125
        $region46: #{tpu_custom_call.1} parent=35 // pred_check_branch
          %311 = sbr.rel (%p309) target = $region48
        $region47: #{tpu_custom_call.1} parent=35 // pred_region
          %312 = dma.done %s305, 64
        $region48: #{tpu_custom_call.1} parent=35 // pred_fallthru
          _
        %s313 = sand.u32 %s142, 1
        %s314 = scalar_lea.sflag [#allocation12], %s313
        %s315 = sand.u32 %s142, 1
        %s316 = smul.addr %s315, 8
        %s317 = scalar_lea.vmem [#allocation11], %s316
        // Predicated region
        $region49: #{tpu_custom_call.1} parent=35 // pred_check
          %p318 = pneg %p155
        $region50: #{tpu_custom_call.1} parent=35 // pred_check_branch
          %320 = sbr.rel (%p318) target = $region52
        $region51: #{tpu_custom_call.1} parent=35 // pred_region
          %321 = dma.done %s314, 128
        $region52: #{tpu_custom_call.1} parent=35 // pred_fallthru
          _
        %s322 = sand.u32 %s56, 1
        %s323 = scalar_lea.sflag [#allocation6], %s322
        %s324 = sand.u32 %s56, 1
        %s325 = smul.addr %s324, 4
        %s326 = scalar_lea.vmem [#allocation5], %s325
        %p327 = pneg %p69
        %p328 = pneg %p66
        %s329 = sand.u32 %s27, 1
        %s330 = scalar_lea.sflag [#allocation9], %s329
        %s331 = sand.u32 %s84, 1
        %s332 = smul.addr %s331, 4
        %s333 = scalar_lea.vmem [#allocation8], %s332
        %p334 = pneg %p97
        %p335 = pneg %p94
        %s336 = sand.u32 %s27, 1
        %s337 = scalar_lea.sflag [#allocation9], %s336
        %s338 = sand.u32 %s112, 1
        %s339 = smul.addr %s338, 4
        %s340 = scalar_lea.vmem [#allocation10], %s339
        %p341 = pneg %p125
        %p342 = pneg %p122
        %s343 = sand.u32 %s142, 1
        %s344 = scalar_lea.sflag [#allocation12], %s343
        %s345 = sand.u32 %s142, 1
        %s346 = smul.addr %s345, 8
        %s347 = scalar_lea.vmem [#allocation11], %s346
        %p348 = pneg %p155
        %p349 = pneg %p152
        %p350 = pneg %p183
        %p351 = pneg %p180
        %s352 = sand.u32 %s170, 1
        %s353 = scalar_lea.sflag [#allocation7], %s352
        %s354 = sand.u32 %s170, 1
        %s355 = smul.addr %s354, 8
        %s356 = scalar_lea.vmem [#allocation13], %s355
        %p358 = scmp.eq.s32.totalorder %s34, 0
        // Predicated region
        $region53: #{tpu_custom_call.1} parent=35 // pred_check
          %p359 = pneg %p358
        $region54: #{tpu_custom_call.1} parent=35 // pred_check_branch
          %361 = sbr.rel (%p359) target = $region56
        $region55: #{tpu_custom_call.1} parent=35 // pred_region
          %v362 = vld [vmem:[%s290] sm:$0xf]
          %v363 = vunpack.c.l.bf16 %v362
          %v364 = vmul.f32 %v363, 0.35355338
          %v365 = vpack.c.bf16 %v364, %v364
          %vm366 = vcmask 257024
          %367 = vst.msk [vmem:[#allocation2] sm:$0xf] %vm366, %v365
          %vm368 = vcmask 7168
          %369 = vst.msk [vmem:[#allocation3] sm:$0xff] %vm368, -inf
          %370 = vst.msk [vmem:[#allocation3 + $0x8] sm:$0xff] %vm368, -inf
          %371 = vst.msk [vmem:[#allocation3 + $0x10] sm:$0xff] %vm368, -inf
          %372 = vst.msk [vmem:[#allocation3 + $0x18] sm:$0xff] %vm368, -inf
          %vm373 = vcmask 15368
          %374 = vst.msk [vmem:[#allocation3] sm:$0xff] %vm373, 0.0
          %375 = vst.msk [vmem:[#allocation3 + $0x8] sm:$0xff] %vm373, 0.0
          %376 = vst.msk [vmem:[#allocation3 + $0x10] sm:$0xff] %vm373, 0.0
          %377 = vst.msk [vmem:[#allocation3 + $0x18] sm:$0xff] %vm373, 0.0
          %vm378 = vcmask 64512
          %379 = vst.msk [vmem:[#allocation4] sm:$0xff] %vm378, 0.0
          %380 = vst.msk [vmem:[#allocation4 + $0x8] sm:$0xff] %vm378, 0.0
          %381 = vst.msk [vmem:[#allocation4 + $0x10] sm:$0xff] %vm378, 0.0
          %382 = vst.msk [vmem:[#allocation4 + $0x18] sm:$0xff] %vm378, 0.0
        $region56: #{tpu_custom_call.1} parent=35 // pred_fallthru
          _
        %v383 = vld [vmem:[%s317] sm:$0xff]
        %vm384 = vcmp.ne.s32.totalorder %v383, 0
        %v385 = vld [vmem:[#allocation2] sm:$0xf]
        %v386 = vld [vmem:[%s299] sm:$0xf]
        %v387 = vld [vmem:[%s308] sm:$0xf]
        %vm388 = vcmask 64512
        %v390 = vsel %vm388, %v385, 0
        %v393 = vsel %vm388, %v386, 0
        %395 = vmatprep.subr.bf16.mxu0 0
        %396 = vmatpush1.bf16.xpose.msra.mxu0 0
        %397 = vmatprep.subr.bf16.mxu0 0
        %398 = vmatpush1.bf16.xpose.msra.mxu0 0
        %399 = vmatprep.subr.bf16.mxu0 0
        %400 = vmatpush1.bf16.xpose.msra.mxu0 0
        %401 = vmatprep.subr.bf16.mxu0 0
        %402 = vmatpush1.bf16.xpose.msra.mxu0 0
        %403 = vmatprep.subr.bf16.mxu0 0
        %404 = vmatpush1.bf16.xpose.msra.mxu0 0
        %405 = vmatprep.subr.bf16.mxu0 0
        %406 = vmatpush1.bf16.xpose.msra.mxu0 0
        %407 = vmatprep.subr.bf16.mxu0 0
        %408 = vmatpush1.bf16.xpose.msra.mxu0 0
        %409 = vmatprep.subr.bf16.mxu0 0
        %410 = vmatpush1.bf16.xpose.msra.mxu0 %v393
        %411 = vmatprep.subr.bf16.mxu0 0
        %412 = vmatpush2.bf16.xpose.msra.mxu0 0
        %413 = vmatprep.subr.bf16.mxu0 0
        %414 = vmatpush2.bf16.xpose.msra.mxu0 0
        %415 = vmatprep.subr.bf16.mxu0 0
        %416 = vmatpush2.bf16.xpose.msra.mxu0 0
        %417 = vmatprep.subr.bf16.mxu0 0
        %418 = vmatpush2.bf16.xpose.msra.mxu0 0
        %419 = vmatprep.subr.bf16.mxu0 0
        %420 = vmatpush2.bf16.xpose.msra.mxu0 0
        %421 = vmatprep.subr.bf16.mxu0 0
        %422 = vmatpush2.bf16.xpose.msra.mxu0 0
        %423 = vmatprep.subr.bf16.mxu0 0
        %424 = vmatpush2.bf16.xpose.msra.mxu0 0
        %425 = vmatprep.subr.bf16.mxu0 0
        %426 = vmatpush2.bf16.xpose.msra.mxu0 0
        %427 = vmatprep.mubr.bf16.mxu0 0
        %428 = vmatmul.mubr.bf16.gmra.mxu0 %v390
        %v429 = vpop.f32.mrf.mxu0
        %v430 = vadd.f32 0.0, %v429
        %v431 = vpop.f32.mrf.mxu0
        %v432 = vpop.f32.mrf.mxu0
        %v433 = vpop.f32.mrf.mxu0
        %434 = vdwg.mxu0
        %v435 = vsel %vm384, %v430, -1e+09
        %v436 = vld [vmem:[#allocation3] sm:$0xff]
        %v437 = vsel %vm388, %v435, -inf
        %438 = vmax.xlane.f32.xlu0 %v437
        %v439 = vpop.xlane.xlu0 %438
        %v440 = vmax.f32 %v436, %v439
        %v441 = vsub.f32 %v436, %v440
        %v442 = vmul.f32 %v441, 1.442695
        %v443 = vpow.pop %v442
        %445 = vset.pattern.permute.xlu0 0
        %446 = vperm.xlu0 %445, %v440
        %v447 = vpop.permute.xlu0 %446
        %v449 = vsub.f32 %v435, %v447
        %v450 = vmul.f32 %v449, 1.442695
        %v451 = vpow.pop %v450
        %453 = vrot.lane.b32.xlu0 %v436, 127
        %v454 = vpop.permute.xlu0 %453
        %v456 = vmul.f32 %v443, %v454
        %v457 = vsel %vm388, %v451, 0.0
        %458 = vadd.xlane.f32.xlu0 %v457
        %v459 = vpop.xlane.xlu0 %458
        %v460 = vadd.f32 %v456, %v459
        %462 = vrot.lane.b32.xlu0 %v460, 1
        %v463 = vpop.permute.xlu0 %462
        %vm465 = vcmask 15368
        %466 = vst.msk [vmem:[#allocation3] sm:$0xff] %vm465, %v463
        %v467 = vld [vmem:[#allocation4] sm:$0xff]
        %469 = vset.pattern.permute.xlu0 0
        %470 = vperm.xlu0 %469, %v443
        %v471 = vpop.permute.xlu0 %470
        %v473 = vmul.f32 %v471, %v467
        %v474 = vpack.c.bf16 %v451, %v451
        %v476 = vsel %vm388, %v474, 0
        %vm478 = vcmask 1043456
        %v480 = vsel %vm478, %v387, 0
        %482 = vmatprep.subr.bf16.mxu0 0
        %483 = vmatpush1.bf16.msra.mxu0 0
        %484 = vmatprep.subr.bf16.mxu0 0
        %485 = vmatpush1.bf16.msra.mxu0 0
        %486 = vmatprep.subr.bf16.mxu0 0
        %487 = vmatpush1.bf16.msra.mxu0 0
        %488 = vmatprep.subr.bf16.mxu0 0
        %489 = vmatpush1.bf16.msra.mxu0 0
        %490 = vmatprep.subr.bf16.mxu0 0
        %491 = vmatpush1.bf16.msra.mxu0 0
        %492 = vmatprep.subr.bf16.mxu0 0
        %493 = vmatpush1.bf16.msra.mxu0 0
        %494 = vmatprep.subr.bf16.mxu0 0
        %495 = vmatpush1.bf16.msra.mxu0 0
        %496 = vmatprep.subr.bf16.mxu0 0
        %497 = vmatpush1.bf16.msra.mxu0 %v480
        %498 = vmatprep.subr.bf16.mxu0 0
        %499 = vmatpush2.bf16.msra.mxu0 0
        %500 = vmatprep.subr.bf16.mxu0 0
        %501 = vmatpush2.bf16.msra.mxu0 0
        %502 = vmatprep.subr.bf16.mxu0 0
        %503 = vmatpush2.bf16.msra.mxu0 0
        %504 = vmatprep.subr.bf16.mxu0 0
        %505 = vmatpush2.bf16.msra.mxu0 0
        %506 = vmatprep.subr.bf16.mxu0 0
        %507 = vmatpush2.bf16.msra.mxu0 0
        %508 = vmatprep.subr.bf16.mxu0 0
        %509 = vmatpush2.bf16.msra.mxu0 0
        %510 = vmatprep.subr.bf16.mxu0 0
        %511 = vmatpush2.bf16.msra.mxu0 0
        %512 = vmatprep.subr.bf16.mxu0 0
        %513 = vmatpush2.bf16.msra.mxu0 0
        %514 = vmatprep.mubr.bf16.mxu0 0
        %515 = vmatmul.mubr.bf16.gmra.mxu0 %v476
        %v516 = vpop.f32.mrf.mxu0
        %v517 = vadd.f32 0.0, %v516
        %v518 = vpop.f32.mrf.mxu0
        %v519 = vpop.f32.mrf.mxu0
        %v520 = vpop.f32.mrf.mxu0
        %521 = vdwg.mxu0
        %v522 = vadd.f32 %v473, %v517
        %523 = vst.msk [vmem:[#allocation4] sm:$0xff] %vm388, %v522
        %vm524 = vcmask 7168
        %525 = vst.msk [vmem:[#allocation3] sm:$0xff] %vm524, %v440
        %v526 = vld [vmem:[#allocation2] sm:$0xf]
        %v527 = vld [vmem:[%s299] sm:$0xf]
        %v528 = vld [vmem:[%s308] sm:$0xf]
        %v530 = vunpack.c.l.b16 %v526
        %v531 = vpack.c.b16 %v530, %v530
        %532 = vrot.lane.b32.xlu0 %v531, 120
        %v533 = vpop.permute.xlu0 %532
        %v535 = vunpack.c.l.b16 %v527
        %v536 = vpack.c.b16 %v535, %v535
        %537 = vrot.lane.b32.xlu0 %v536, 120
        %v538 = vpop.permute.xlu0 %537
        %v540 = vsel %vm388, %v533, 0
        %v543 = vsel %vm388, %v538, 0
        %545 = vmatprep.subr.bf16.mxu0 0
        %546 = vmatpush1.bf16.xpose.msra.mxu0 0
        %547 = vmatprep.subr.bf16.mxu0 0
        %548 = vmatpush1.bf16.xpose.msra.mxu0 0
        %549 = vmatprep.subr.bf16.mxu0 0
        %550 = vmatpush1.bf16.xpose.msra.mxu0 0
        %551 = vmatprep.subr.bf16.mxu0 0
        %552 = vmatpush1.bf16.xpose.msra.mxu0 0
        %553 = vmatprep.subr.bf16.mxu0 0
        %554 = vmatpush1.bf16.xpose.msra.mxu0 0
        %555 = vmatprep.subr.bf16.mxu0 0
        %556 = vmatpush1.bf16.xpose.msra.mxu0 0
        %557 = vmatprep.subr.bf16.mxu0 0
        %558 = vmatpush1.bf16.xpose.msra.mxu0 0
        %559 = vmatprep.subr.bf16.mxu0 0
        %560 = vmatpush1.bf16.xpose.msra.mxu0 %v543
        %561 = vmatprep.subr.bf16.mxu0 0
        %562 = vmatpush2.bf16.xpose.msra.mxu0 0
        %563 = vmatprep.subr.bf16.mxu0 0
        %564 = vmatpush2.bf16.xpose.msra.mxu0 0
        %565 = vmatprep.subr.bf16.mxu0 0
        %566 = vmatpush2.bf16.xpose.msra.mxu0 0
        %567 = vmatprep.subr.bf16.mxu0 0
        %568 = vmatpush2.bf16.xpose.msra.mxu0 0
        %569 = vmatprep.subr.bf16.mxu0 0
        %570 = vmatpush2.bf16.xpose.msra.mxu0 0
        %571 = vmatprep.subr.bf16.mxu0 0
        %572 = vmatpush2.bf16.xpose.msra.mxu0 0
        %573 = vmatprep.subr.bf16.mxu0 0
        %574 = vmatpush2.bf16.xpose.msra.mxu0 0
        %575 = vmatprep.subr.bf16.mxu0 0
        %576 = vmatpush2.bf16.xpose.msra.mxu0 0
        %577 = vmatprep.mubr.bf16.mxu0 0
        %578 = vmatmul.mubr.bf16.gmra.mxu0 %v540
        %v579 = vpop.f32.mrf.mxu0
        %v580 = vadd.f32 0.0, %v579
        %v581 = vpop.f32.mrf.mxu0
        %v582 = vpop.f32.mrf.mxu0
        %v583 = vpop.f32.mrf.mxu0
        %584 = vdwg.mxu0
        %v585 = vsel %vm384, %v580, -1e+09
        %s586 = scalar_lea.vmem [#allocation3], 8
        %v587 = vld [vmem:[%s586] sm:$0xff]
        %v588 = vsel %vm388, %v585, -inf
        %589 = vmax.xlane.f32.xlu0 %v588
        %v590 = vpop.xlane.xlu0 %589
        %v591 = vmax.f32 %v587, %v590
        %v592 = vsub.f32 %v587, %v591
        %v593 = vmul.f32 %v592, 1.442695
        %v594 = vpow.pop %v593
        %596 = vset.pattern.permute.xlu0 0
        %597 = vperm.xlu0 %596, %v591
        %v598 = vpop.permute.xlu0 %597
        %v600 = vsub.f32 %v585, %v598
        %v601 = vmul.f32 %v600, 1.442695
        %v602 = vpow.pop %v601
        %604 = vrot.lane.b32.xlu0 %v587, 127
        %v605 = vpop.permute.xlu0 %604
        %v607 = vmul.f32 %v594, %v605
        %v608 = vsel %vm388, %v602, 0.0
        %609 = vadd.xlane.f32.xlu0 %v608
        %v610 = vpop.xlane.xlu0 %609
        %v611 = vadd.f32 %v607, %v610
        %613 = vrot.lane.b32.xlu0 %v611, 1
        %v614 = vpop.permute.xlu0 %613
        %616 = vst.msk [vmem:[%s586] sm:$0xff] %vm465, %v614
        %s617 = scalar_lea.vmem [#allocation4], 8
        %v618 = vld [vmem:[%s617] sm:$0xff]
        %620 = vset.pattern.permute.xlu0 0
        %621 = vperm.xlu0 %620, %v594
        %v622 = vpop.permute.xlu0 %621
        %v624 = vmul.f32 %v622, %v618
        %v625 = vpack.c.bf16 %v602, %v602
        %v627 = vunpack.c.l.b16 %v528
        %v628 = vpack.c.b16 %v627, %v627
        %629 = vrot.lane.b32.xlu0 %v628, 120
        %v630 = vpop.permute.xlu0 %629
        %v632 = vsel %vm388, %v625, 0
        %v635 = vsel %vm478, %v630, 0
        %637 = vmatprep.subr.bf16.mxu0 0
        %638 = vmatpush1.bf16.msra.mxu0 0
        %639 = vmatprep.subr.bf16.mxu0 0
        %640 = vmatpush1.bf16.msra.mxu0 0
        %641 = vmatprep.subr.bf16.mxu0 0
        %642 = vmatpush1.bf16.msra.mxu0 0
        %643 = vmatprep.subr.bf16.mxu0 0
        %644 = vmatpush1.bf16.msra.mxu0 0
        %645 = vmatprep.subr.bf16.mxu0 0
        %646 = vmatpush1.bf16.msra.mxu0 0
        %647 = vmatprep.subr.bf16.mxu0 0
        %648 = vmatpush1.bf16.msra.mxu0 0
        %649 = vmatprep.subr.bf16.mxu0 0
        %650 = vmatpush1.bf16.msra.mxu0 0
        %651 = vmatprep.subr.bf16.mxu0 0
        %652 = vmatpush1.bf16.msra.mxu0 %v635
        %653 = vmatprep.subr.bf16.mxu0 0
        %654 = vmatpush2.bf16.msra.mxu0 0
        %655 = vmatprep.subr.bf16.mxu0 0
        %656 = vmatpush2.bf16.msra.mxu0 0
        %657 = vmatprep.subr.bf16.mxu0 0
        %658 = vmatpush2.bf16.msra.mxu0 0
        %659 = vmatprep.subr.bf16.mxu0 0
        %660 = vmatpush2.bf16.msra.mxu0 0
        %661 = vmatprep.subr.bf16.mxu0 0
        %662 = vmatpush2.bf16.msra.mxu0 0
        %663 = vmatprep.subr.bf16.mxu0 0
        %664 = vmatpush2.bf16.msra.mxu0 0
        %665 = vmatprep.subr.bf16.mxu0 0
        %666 = vmatpush2.bf16.msra.mxu0 0
        %667 = vmatprep.subr.bf16.mxu0 0
        %668 = vmatpush2.bf16.msra.mxu0 0
        %669 = vmatprep.mubr.bf16.mxu0 0
        %670 = vmatmul.mubr.bf16.gmra.mxu0 %v632
        %v671 = vpop.f32.mrf.mxu0
        %v672 = vadd.f32 0.0, %v671
        %v673 = vpop.f32.mrf.mxu0
        %v674 = vpop.f32.mrf.mxu0
        %v675 = vpop.f32.mrf.mxu0
        %676 = vdwg.mxu0
        %v677 = vadd.f32 %v624, %v672
        %678 = vst.msk [vmem:[%s617] sm:$0xff] %vm388, %v677
        %679 = vst.msk [vmem:[%s586] sm:$0xff] %vm524, %v591
        %v680 = vld [vmem:[#allocation2] sm:$0xf]
        %v681 = vld [vmem:[%s299] sm:$0xf]
        %v682 = vld [vmem:[%s308] sm:$0xf]
        %v684 = vunpack.c.l.b16 %v680
        %v685 = vpack.c.b16 %v684, %v684
        %686 = vrot.lane.b32.xlu0 %v685, 112
        %v687 = vpop.permute.xlu0 %686
        %v689 = vunpack.c.l.b16 %v681
        %v690 = vpack.c.b16 %v689, %v689
        %691 = vrot.lane.b32.xlu0 %v690, 112
        %v692 = vpop.permute.xlu0 %691
        %v694 = vsel %vm388, %v687, 0
        %v697 = vsel %vm388, %v692, 0
        %699 = vmatprep.subr.bf16.mxu0 0
        %700 = vmatpush1.bf16.xpose.msra.mxu0 0
        %701 = vmatprep.subr.bf16.mxu0 0
        %702 = vmatpush1.bf16.xpose.msra.mxu0 0
        %703 = vmatprep.subr.bf16.mxu0 0
        %704 = vmatpush1.bf16.xpose.msra.mxu0 0
        %705 = vmatprep.subr.bf16.mxu0 0
        %706 = vmatpush1.bf16.xpose.msra.mxu0 0
        %707 = vmatprep.subr.bf16.mxu0 0
        %708 = vmatpush1.bf16.xpose.msra.mxu0 0
        %709 = vmatprep.subr.bf16.mxu0 0
        %710 = vmatpush1.bf16.xpose.msra.mxu0 0
        %711 = vmatprep.subr.bf16.mxu0 0
        %712 = vmatpush1.bf16.xpose.msra.mxu0 0
        %713 = vmatprep.subr.bf16.mxu0 0
        %714 = vmatpush1.bf16.xpose.msra.mxu0 %v697
        %715 = vmatprep.subr.bf16.mxu0 0
        %716 = vmatpush2.bf16.xpose.msra.mxu0 0
        %717 = vmatprep.subr.bf16.mxu0 0
        %718 = vmatpush2.bf16.xpose.msra.mxu0 0
        %719 = vmatprep.subr.bf16.mxu0 0
        %720 = vmatpush2.bf16.xpose.msra.mxu0 0
        %721 = vmatprep.subr.bf16.mxu0 0
        %722 = vmatpush2.bf16.xpose.msra.mxu0 0
        %723 = vmatprep.subr.bf16.mxu0 0
        %724 = vmatpush2.bf16.xpose.msra.mxu0 0
        %725 = vmatprep.subr.bf16.mxu0 0
        %726 = vmatpush2.bf16.xpose.msra.mxu0 0
        %727 = vmatprep.subr.bf16.mxu0 0
        %728 = vmatpush2.bf16.xpose.msra.mxu0 0
        %729 = vmatprep.subr.bf16.mxu0 0
        %730 = vmatpush2.bf16.xpose.msra.mxu0 0
        %731 = vmatprep.mubr.bf16.mxu0 0
        %732 = vmatmul.mubr.bf16.gmra.mxu0 %v694
        %v733 = vpop.f32.mrf.mxu0
        %v734 = vadd.f32 0.0, %v733
        %v735 = vpop.f32.mrf.mxu0
        %v736 = vpop.f32.mrf.mxu0
        %v737 = vpop.f32.mrf.mxu0
        %738 = vdwg.mxu0
        %v739 = vsel %vm384, %v734, -1e+09
        %s740 = scalar_lea.vmem [#allocation3], 16
        %v741 = vld [vmem:[%s740] sm:$0xff]
        %v742 = vsel %vm388, %v739, -inf
        %743 = vmax.xlane.f32.xlu0 %v742
        %v744 = vpop.xlane.xlu0 %743
        %v745 = vmax.f32 %v741, %v744
        %v746 = vsub.f32 %v741, %v745
        %v747 = vmul.f32 %v746, 1.442695
        %v748 = vpow.pop %v747
        %750 = vset.pattern.permute.xlu0 0
        %751 = vperm.xlu0 %750, %v745
        %v752 = vpop.permute.xlu0 %751
        %v754 = vsub.f32 %v739, %v752
        %v755 = vmul.f32 %v754, 1.442695
        %v756 = vpow.pop %v755
        %758 = vrot.lane.b32.xlu0 %v741, 127
        %v759 = vpop.permute.xlu0 %758
        %v761 = vmul.f32 %v748, %v759
        %v762 = vsel %vm388, %v756, 0.0
        %763 = vadd.xlane.f32.xlu0 %v762
        %v764 = vpop.xlane.xlu0 %763
        %v765 = vadd.f32 %v761, %v764
        %767 = vrot.lane.b32.xlu0 %v765, 1
        %v768 = vpop.permute.xlu0 %767
        %770 = vst.msk [vmem:[%s740] sm:$0xff] %vm465, %v768
        %s771 = scalar_lea.vmem [#allocation4], 16
        %v772 = vld [vmem:[%s771] sm:$0xff]
        %774 = vset.pattern.permute.xlu0 0
        %775 = vperm.xlu0 %774, %v748
        %v776 = vpop.permute.xlu0 %775
        %v778 = vmul.f32 %v776, %v772
        %v779 = vpack.c.bf16 %v756, %v756
        %v781 = vunpack.c.l.b16 %v682
        %v782 = vpack.c.b16 %v781, %v781
        %783 = vrot.lane.b32.xlu0 %v782, 112
        %v784 = vpop.permute.xlu0 %783
        %v786 = vsel %vm388, %v779, 0
        %v789 = vsel %vm478, %v784, 0
        %791 = vmatprep.subr.bf16.mxu0 0
        %792 = vmatpush1.bf16.msra.mxu0 0
        %793 = vmatprep.subr.bf16.mxu0 0
        %794 = vmatpush1.bf16.msra.mxu0 0
        %795 = vmatprep.subr.bf16.mxu0 0
        %796 = vmatpush1.bf16.msra.mxu0 0
        %797 = vmatprep.subr.bf16.mxu0 0
        %798 = vmatpush1.bf16.msra.mxu0 0
        %799 = vmatprep.subr.bf16.mxu0 0
        %800 = vmatpush1.bf16.msra.mxu0 0
        %801 = vmatprep.subr.bf16.mxu0 0
        %802 = vmatpush1.bf16.msra.mxu0 0
        %803 = vmatprep.subr.bf16.mxu0 0
        %804 = vmatpush1.bf16.msra.mxu0 0
        %805 = vmatprep.subr.bf16.mxu0 0
        %806 = vmatpush1.bf16.msra.mxu0 %v789
        %807 = vmatprep.subr.bf16.mxu0 0
        %808 = vmatpush2.bf16.msra.mxu0 0
        %809 = vmatprep.subr.bf16.mxu0 0
        %810 = vmatpush2.bf16.msra.mxu0 0
        %811 = vmatprep.subr.bf16.mxu0 0
        %812 = vmatpush2.bf16.msra.mxu0 0
        %813 = vmatprep.subr.bf16.mxu0 0
        %814 = vmatpush2.bf16.msra.mxu0 0
        %815 = vmatprep.subr.bf16.mxu0 0
        %816 = vmatpush2.bf16.msra.mxu0 0
        %817 = vmatprep.subr.bf16.mxu0 0
        %818 = vmatpush2.bf16.msra.mxu0 0
        %819 = vmatprep.subr.bf16.mxu0 0
        %820 = vmatpush2.bf16.msra.mxu0 0
        %821 = vmatprep.subr.bf16.mxu0 0
        %822 = vmatpush2.bf16.msra.mxu0 0
        %823 = vmatprep.mubr.bf16.mxu0 0
        %824 = vmatmul.mubr.bf16.gmra.mxu0 %v786
        %v825 = vpop.f32.mrf.mxu0
        %v826 = vadd.f32 0.0, %v825
        %v827 = vpop.f32.mrf.mxu0
        %v828 = vpop.f32.mrf.mxu0
        %v829 = vpop.f32.mrf.mxu0
        %830 = vdwg.mxu0
        %v831 = vadd.f32 %v778, %v826
        %832 = vst.msk [vmem:[%s771] sm:$0xff] %vm388, %v831
        %833 = vst.msk [vmem:[%s740] sm:$0xff] %vm524, %v745
        %v834 = vld [vmem:[#allocation2] sm:$0xf]
        %v835 = vld [vmem:[%s299] sm:$0xf]
        %v836 = vld [vmem:[%s308] sm:$0xf]
        %v838 = vunpack.c.l.b16 %v834
        %v839 = vpack.c.b16 %v838, %v838
        %840 = vrot.lane.b32.xlu0 %v839, 104
        %v841 = vpop.permute.xlu0 %840
        %v843 = vunpack.c.l.b16 %v835
        %v844 = vpack.c.b16 %v843, %v843
        %845 = vrot.lane.b32.xlu0 %v844, 104
        %v846 = vpop.permute.xlu0 %845
        %v848 = vsel %vm388, %v841, 0
        %v851 = vsel %vm388, %v846, 0
        %853 = vmatprep.subr.bf16.mxu0 0
        %854 = vmatpush1.bf16.xpose.msra.mxu0 0
        %855 = vmatprep.subr.bf16.mxu0 0
        %856 = vmatpush1.bf16.xpose.msra.mxu0 0
        %857 = vmatprep.subr.bf16.mxu0 0
        %858 = vmatpush1.bf16.xpose.msra.mxu0 0
        %859 = vmatprep.subr.bf16.mxu0 0
        %860 = vmatpush1.bf16.xpose.msra.mxu0 0
        %861 = vmatprep.subr.bf16.mxu0 0
        %862 = vmatpush1.bf16.xpose.msra.mxu0 0
        %863 = vmatprep.subr.bf16.mxu0 0
        %864 = vmatpush1.bf16.xpose.msra.mxu0 0
        %865 = vmatprep.subr.bf16.mxu0 0
        %866 = vmatpush1.bf16.xpose.msra.mxu0 0
        %867 = vmatprep.subr.bf16.mxu0 0
        %868 = vmatpush1.bf16.xpose.msra.mxu0 %v851
        %869 = vmatprep.subr.bf16.mxu0 0
        %870 = vmatpush2.bf16.xpose.msra.mxu0 0
        %871 = vmatprep.subr.bf16.mxu0 0
        %872 = vmatpush2.bf16.xpose.msra.mxu0 0
        %873 = vmatprep.subr.bf16.mxu0 0
        %874 = vmatpush2.bf16.xpose.msra.mxu0 0
        %875 = vmatprep.subr.bf16.mxu0 0
        %876 = vmatpush2.bf16.xpose.msra.mxu0 0
        %877 = vmatprep.subr.bf16.mxu0 0
        %878 = vmatpush2.bf16.xpose.msra.mxu0 0
        %879 = vmatprep.subr.bf16.mxu0 0
        %880 = vmatpush2.bf16.xpose.msra.mxu0 0
        %881 = vmatprep.subr.bf16.mxu0 0
        %882 = vmatpush2.bf16.xpose.msra.mxu0 0
        %883 = vmatprep.subr.bf16.mxu0 0
        %884 = vmatpush2.bf16.xpose.msra.mxu0 0
        %885 = vmatprep.mubr.bf16.mxu0 0
        %886 = vmatmul.mubr.bf16.gmra.mxu0 %v848
        %v887 = vpop.f32.mrf.mxu0
        %v888 = vadd.f32 0.0, %v887
        %v889 = vpop.f32.mrf.mxu0
        %v890 = vpop.f32.mrf.mxu0
        %v891 = vpop.f32.mrf.mxu0
        %892 = vdwg.mxu0
        %v893 = vsel %vm384, %v888, -1e+09
        %s894 = scalar_lea.vmem [#allocation3], 24
        %v895 = vld [vmem:[%s894] sm:$0xff]
        %v896 = vsel %vm388, %v893, -inf
        %897 = vmax.xlane.f32.xlu0 %v896
        %v898 = vpop.xlane.xlu0 %897
        %v899 = vmax.f32 %v895, %v898
        %v900 = vsub.f32 %v895, %v899
        %v901 = vmul.f32 %v900, 1.442695
        %v902 = vpow.pop %v901
        %904 = vset.pattern.permute.xlu0 0
        %905 = vperm.xlu0 %904, %v899
        %v906 = vpop.permute.xlu0 %905
        %v908 = vsub.f32 %v893, %v906
        %v909 = vmul.f32 %v908, 1.442695
        %v910 = vpow.pop %v909
        %912 = vrot.lane.b32.xlu0 %v895, 127
        %v913 = vpop.permute.xlu0 %912
        %v915 = vmul.f32 %v902, %v913
        %v916 = vsel %vm388, %v910, 0.0
        %917 = vadd.xlane.f32.xlu0 %v916
        %v918 = vpop.xlane.xlu0 %917
        %v919 = vadd.f32 %v915, %v918
        %921 = vrot.lane.b32.xlu0 %v919, 1
        %v922 = vpop.permute.xlu0 %921
        %924 = vst.msk [vmem:[%s894] sm:$0xff] %vm465, %v922
        %s925 = scalar_lea.vmem [#allocation4], 24
        %v926 = vld [vmem:[%s925] sm:$0xff]
        %928 = vset.pattern.permute.xlu0 0
        %929 = vperm.xlu0 %928, %v902
        %v930 = vpop.permute.xlu0 %929
        %v932 = vmul.f32 %v930, %v926
        %v933 = vpack.c.bf16 %v910, %v910
        %v935 = vunpack.c.l.b16 %v836
        %v936 = vpack.c.b16 %v935, %v935
        %937 = vrot.lane.b32.xlu0 %v936, 104
        %v938 = vpop.permute.xlu0 %937
        %v940 = vsel %vm388, %v933, 0
        %v943 = vsel %vm478, %v938, 0
        %945 = vmatprep.subr.bf16.mxu0 0
        %946 = vmatpush1.bf16.msra.mxu0 0
        %947 = vmatprep.subr.bf16.mxu0 0
        %948 = vmatpush1.bf16.msra.mxu0 0
        %949 = vmatprep.subr.bf16.mxu0 0
        %950 = vmatpush1.bf16.msra.mxu0 0
        %951 = vmatprep.subr.bf16.mxu0 0
        %952 = vmatpush1.bf16.msra.mxu0 0
        %953 = vmatprep.subr.bf16.mxu0 0
        %954 = vmatpush1.bf16.msra.mxu0 0
        %955 = vmatprep.subr.bf16.mxu0 0
        %956 = vmatpush1.bf16.msra.mxu0 0
        %957 = vmatprep.subr.bf16.mxu0 0
        %958 = vmatpush1.bf16.msra.mxu0 0
        %959 = vmatprep.subr.bf16.mxu0 0
        %960 = vmatpush1.bf16.msra.mxu0 %v943
        %961 = vmatprep.subr.bf16.mxu0 0
        %962 = vmatpush2.bf16.msra.mxu0 0
        %963 = vmatprep.subr.bf16.mxu0 0
        %964 = vmatpush2.bf16.msra.mxu0 0
        %965 = vmatprep.subr.bf16.mxu0 0
        %966 = vmatpush2.bf16.msra.mxu0 0
        %967 = vmatprep.subr.bf16.mxu0 0
        %968 = vmatpush2.bf16.msra.mxu0 0
        %969 = vmatprep.subr.bf16.mxu0 0
        %970 = vmatpush2.bf16.msra.mxu0 0
        %971 = vmatprep.subr.bf16.mxu0 0
        %972 = vmatpush2.bf16.msra.mxu0 0
        %973 = vmatprep.subr.bf16.mxu0 0
        %974 = vmatpush2.bf16.msra.mxu0 0
        %975 = vmatprep.subr.bf16.mxu0 0
        %976 = vmatpush2.bf16.msra.mxu0 0
        %977 = vmatprep.mubr.bf16.mxu0 0
        %978 = vmatmul.mubr.bf16.gmra.mxu0 %v940
        %v979 = vpop.f32.mrf.mxu0
        %v980 = vadd.f32 0.0, %v979
        %v981 = vpop.f32.mrf.mxu0
        %v982 = vpop.f32.mrf.mxu0
        %v983 = vpop.f32.mrf.mxu0
        %984 = vdwg.mxu0
        %v985 = vadd.f32 %v932, %v980
        %986 = vst.msk [vmem:[%s925] sm:$0xff] %vm388, %v985
        %987 = vst.msk [vmem:[%s894] sm:$0xff] %vm524, %v899
        // Predicated region
        $region57: #{tpu_custom_call.1} parent=35 // pred_check
          %p988 = pneg %p358
        $region58: #{tpu_custom_call.1} parent=35 // pred_check_branch
          %990 = sbr.rel (%p988) target = $region60
        $region59: #{tpu_custom_call.1} parent=35 // pred_region
          %v991 = vld [vmem:[#allocation3] sm:$0xff]
          %v992 = vrcp.pop %v991
          %v993 = vld [vmem:[#allocation4] sm:$0xff]
          %995 = vset.pattern.permute.xlu0 1
          %996 = vperm.xlu0 %995, %v992
          %v997 = vpop.permute.xlu0 %996
          %v999 = vmul.f32 %v993, %v997
          %1000 = vst.msk [vmem:[%s356] sm:$0xff] %vm388, %v999
          %v1001 = vld [vmem:[%s586] sm:$0xff]
          %v1002 = vrcp.pop %v1001
          %v1003 = vld [vmem:[%s617] sm:$0xff]
          %1005 = vset.pattern.permute.xlu0 1
          %1006 = vperm.xlu0 %1005, %v1002
          %v1007 = vpop.permute.xlu0 %1006
          %v1009 = vmul.f32 %v1003, %v1007
          %1011 = vrot.lane.b32.xlu0 %v1009, 8
          %v1012 = vpop.permute.xlu0 %1011
          %vm1014 = vcmask 130112
          %1015 = vst.msk [vmem:[%s356] sm:$0xff] %vm1014, %v1012
          %v1016 = vld [vmem:[%s740] sm:$0xff]
          %v1017 = vrcp.pop %v1016
          %v1018 = vld [vmem:[%s771] sm:$0xff]
          %1020 = vset.pattern.permute.xlu0 1
          %1021 = vperm.xlu0 %1020, %v1017
          %v1022 = vpop.permute.xlu0 %1021
          %v1024 = vmul.f32 %v1018, %v1022
          %1026 = vrot.lane.b32.xlu0 %v1024, 16
          %v1027 = vpop.permute.xlu0 %1026
          %vm1029 = vcmask 195712
          %1030 = vst.msk [vmem:[%s356] sm:$0xff] %vm1029, %v1027
          %v1031 = vld [vmem:[%s894] sm:$0xff]
          %v1032 = vrcp.pop %v1031
          %v1033 = vld [vmem:[%s925] sm:$0xff]
          %1035 = vset.pattern.permute.xlu0 1
          %1036 = vperm.xlu0 %1035, %v1032
          %v1037 = vpop.permute.xlu0 %1036
          %v1039 = vmul.f32 %v1033, %v1037
          %1041 = vrot.lane.b32.xlu0 %v1039, 24
          %v1042 = vpop.permute.xlu0 %1041
          %vm1044 = vcmask 261312
          %1045 = vst.msk [vmem:[%s356] sm:$0xff] %vm1044, %v1042
        $region60: #{tpu_custom_call.1} parent=35 // pred_fallthru
          _
        %s1046 = sand.u32 %s170, 1
        %s1047 = scalar_lea.sflag [#allocation7], %s1046
        %s1048 = sand.u32 %s170, 1
        %s1049 = smul.addr %s1048, 8
        %s1050 = scalar_lea.vmem [#allocation13], %s1049
        // Predicated region
        $region61: #{tpu_custom_call.1} parent=35 // pred_check
          %p1051 = pneg %p180
        $region62: #{tpu_custom_call.1} parent=35 // pred_check_branch
          %1053 = sbr.rel (%p1051) target = $region64
        $region63: #{tpu_custom_call.1} parent=35 // pred_region
          %s1055 = ssub.s32 128, 128
          %1056 = vsyncadd %s1047, %s1055
          %s1057 = sadd.s32 %s33, %s32
          %s1058 = smul.addr %s1057, 128
          %s1059 = scalar_lea.hbm %s4, %s1058
          %s1061 = sshll.u32 %s1050, 4
          %s1062 = int_to_ptr.vmem [resolvable:$true] %s1061
          %1064 = dma.vmem_to_hbm [thread:$0]  %s1062, 128, %s1059, %s1047
        $region64: #{tpu_custom_call.1} parent=35 // pred_fallthru
          _
      $region36: #{tpu_custom_call.1} parent=5 // pred_fallthru
        _
      %p1065 = scmp.le.s32.totalorder 2, %s22
      // Predicated region
      $region65: #{tpu_custom_call.1} parent=5 // pred_check
        %p1066 = pneg %p1065
      $region66: #{tpu_custom_call.1} parent=5 // pred_check_branch
        %1068 = sbr.rel (%p1066) target = $region68
      $region67: #{tpu_custom_call.1} parent=5 // pred_region
        %s1069 = ssub.s32 %s22, 2
        // Predicated region
        $region69: #{tpu_custom_call.1} parent=67 // pred_check
          %p1070 = pneg %p186
        $region70: #{tpu_custom_call.1} parent=67 // pred_check_branch
          %1072 = sbr.rel (%p1070) target = $region72
        $region71: #{tpu_custom_call.1} parent=67 // pred_region
          %s1073 = sand.u32 %s171, 1
          %s1074 = scalar_lea.sflag [#allocation7], %s1073
          %s1075 = sand.u32 %s171, 1
          %s1076 = smul.addr %s1075, 8
          %s1077 = scalar_lea.vmem [#allocation13], %s1076
          %1078 = dma.done %s1074, 128
        $region72: #{tpu_custom_call.1} parent=67 // pred_fallthru
          _
      $region68: #{tpu_custom_call.1} parent=5 // pred_fallthru
        _
    $region6: #{tpu_custom_call.1} parent=1 // loop_footer
      %s26 = sadd.s32 1, %s22
    $region7: #{tpu_custom_call.1} parent=1 // loop_footer_branch
      %21 = sbr.rel target = $region3
    $region8: #{tpu_custom_call.1} parent=1 // loop_exit
      _
    %1079 = vsyncpa [#allocation6], 1
    %s1080 = scalar_lea.sflag [#allocation6], 1
    %1081 = vsyncpa %s1080, 1
    %1082 = vsyncpa [#allocation9], 1
    %s1083 = scalar_lea.sflag [#allocation9], 1
    %1084 = vsyncpa %s1083, 1
    %1085 = vsyncpa [#allocation12], 1
    %s1086 = scalar_lea.sflag [#allocation12], 1
    %1087 = vsyncpa %s1086, 1
    %1088 = vsyncpa [#allocation7], 1
    %s1089 = scalar_lea.sflag [#allocation7], 1
    %1090 = vsyncpa %s1089, 1

</llo_original>
